<compile_context>
chip_gen: v7x
topology: tpu7x:2x2x1
jax: 0.10.0
libtpu: 0.0.40
codegen_flags: <defaults>
</compile_context>

<pallas_src>
import functools

import jax
import jax.numpy as jnp
from jax import lax
from jax.experimental import pallas as pl
from jax.experimental.pallas import tpu as pltpu  # noqa: F401  (TPU backend)

# ---- synthetic "config" (stands in for configurations/config.json) ----------
CONFIG = dict(
    n_embd=32,      # C
    block_size=8,   # max T (== T used below)
    dropout=0.0,    # inference: dropout is identity
)
NUM_HEADS = 4
HEAD_SIZE = 8       # head_size * num_heads == n_embd


# -----------------------------------------------------------------------------
# Kernel: single invocation, everything in VMEM.
# -----------------------------------------------------------------------------
def _mha_kernel(x_ref, wqkv_ref, wo_ref, bo_ref, o_ref, *, num_heads, head_size):
    B, T, C = x_ref.shape
    H, hs = num_heads, head_size
    HHS = H * hs
    scale = hs ** -0.5

    x2d = x_ref[...].reshape(B * T, C)                       # (B*T, C)

    # --- fused Q/K/V projection: one MXU push instead of three ---------------
    qkv = jnp.dot(x2d, wqkv_ref[...],
                  preferred_element_type=jnp.float32)        # (B*T, 3*HHS)

    # --- gather per-head q/k/v into a (H*B, T, hs) leading-batch layout ------
    def to_z(base):
        parts = [qkv[:, base + h * hs: base + (h + 1) * hs].reshape(B, T, hs)
                 for h in range(H)]
        return jnp.concatenate(parts, axis=0)                # (H*B, T, hs)

    q = to_z(0 * HHS)
    k = to_z(1 * HHS)
    v = to_z(2 * HHS)

    # --- causal mask, built once per invocation -------------------------------
    row = lax.broadcasted_iota(jnp.int32, (T, T), 0)
    col = lax.broadcasted_iota(jnp.int32, (T, T), 1)
    causal = (row >= col)[None, :, :]                        # (1, T, T)

    # --- scores + numerically stable softmax, batched over (head*batch) ------
    s = jnp.einsum('zqd,zkd->zqk', q, k,
                   preferred_element_type=jnp.float32) * scale
    # -inf is safe here: every causal row has >= 1 unmasked entry.
    s = jnp.where(causal, s, -jnp.inf)
    s = s - jnp.max(s, axis=-1, keepdims=True)
    p = jnp.exp(s)
    # Exact normalization (same math as F.softmax); the approximate EUP
    # reciprocal was the accuracy regression flagged by the failed check.
    p = p / jnp.sum(p, axis=-1, keepdims=True)
    # TODO(synk): training-mode dropout (stochastic masking of p and of the
    # projected output) not implemented; inference semantics (identity) used.

    o_z = jnp.einsum('zqk,zkd->zqd', p, v,
                     preferred_element_type=jnp.float32)     # (H*B, T, hs)

    # --- re-assemble heads along lanes, single output projection + bias ------
    cat = jnp.concatenate(
        [o_z[h * B:(h + 1) * B].reshape(B * T, hs) for h in range(H)],
        axis=-1)                                             # (B*T, HHS)
    y = jnp.dot(cat, wo_ref[...],
                preferred_element_type=jnp.float32) + bo_ref[...]

    # --- one store of the whole (B, T, C) output block ------------------------
    o_ref[...] = y.reshape(B, T, C).astype(o_ref.dtype)


def multi_head_attention(x, wq, wk, wv, wo, bo,
                         *, num_heads=NUM_HEADS, head_size=HEAD_SIZE):
    """x: (B, T, C); wq/wk/wv: (C, H*hs); wo: (H*hs, C); bo: (1, C)."""
    B, T, C = x.shape
    HHS = num_heads * head_size

    # Fuse the three projection weights once in the wrapper: one weight DMA,
    # one MXU matmul for Q, K and V together inside the kernel.
    wqkv = jnp.concatenate([wq, wk, wv], axis=1)             # (C, 3*HHS)

    kernel = functools.partial(_mha_kernel, num_heads=num_heads,
                               head_size=head_size)

    flops = (2 * B * T * C * (3 * HHS)                       # fused QKV proj
             + 2 * (B * num_heads) * T * T * head_size * 2   # scores + P@V
             + 2 * B * T * HHS * C)                          # output proj
    transcendentals = B * num_heads * T * T                  # exp
    bytes_accessed = 4 * (B * T * C                          # x
                          + C * 3 * HHS + HHS * C + C        # weights + bias
                          + B * T * C)                       # output

    # Collapsed grid (no grid / no BlockSpecs): every operand is mapped whole
    # into VMEM and the kernel runs exactly once.  For large B this would be
    # re-tiled with a 'parallel' batch-block axis; at these sizes one
    # invocation is strictly better (per-step overhead dominates otherwise).
    return pl.pallas_call(
        kernel,
        out_shape=jax.ShapeDtypeStruct((B, T, C), x.dtype),
        cost_estimate=pl.CostEstimate(flops=flops,
                                      transcendentals=transcendentals,
                                      bytes_accessed=bytes_accessed),
    )(x, wqkv, wo, bo)


# ---- pure-JAX reference (for correctness check) ------------------------------
def reference(x, wq, wk, wv, wo, bo, num_heads=NUM_HEADS, head_size=HEAD_SIZE):
    hi = lax.Precision.HIGHEST   # accurate f32 baseline on TPU
    B, T, C = x.shape
    q = jnp.einsum('btc,cd->btd', x, wq, precision=hi)
    k = jnp.einsum('btc,cd->btd', x, wk, precision=hi)
    v = jnp.einsum('btc,cd->btd', x, wv, precision=hi)
    mask = jnp.tril(jnp.ones((T, T), dtype=bool))
    outs = []
    for h in range(num_heads):
        sl = slice(h * head_size, (h + 1) * head_size)
        wei = jnp.einsum('bqd,bkd->bqk', q[..., sl], k[..., sl],
                         precision=hi) * head_size ** -0.5
        wei = jnp.where(mask, wei, -jnp.inf)
        wei = jax.nn.softmax(wei, axis=-1)
        outs.append(jnp.einsum('bqk,bkd->bqd', wei, v[..., sl], precision=hi))
    cat = jnp.concatenate(outs, axis=-1)
    return jnp.einsum('btd,dc->btc', cat, wo, precision=hi) + bo


if __name__ == "__main__":
    B, T, C = 2, CONFIG["block_size"], CONFIG["n_embd"]
    HHS = NUM_HEADS * HEAD_SIZE

    key = jax.random.PRNGKey(0)
    kx, kq, kk, kv, ko, kb = jax.random.split(key, 6)

    x = jax.random.normal(kx, (B, T, C), dtype=jnp.float32)
    scale = C ** -0.5
    wq = jax.random.normal(kq, (C, HHS), dtype=jnp.float32) * scale
    wk = jax.random.normal(kk, (C, HHS), dtype=jnp.float32) * scale
    wv = jax.random.normal(kv, (C, HHS), dtype=jnp.float32) * scale
    wo = jax.random.normal(ko, (HHS, C), dtype=jnp.float32) * (HHS ** -0.5)
    bo = jax.random.normal(kb, (1, C), dtype=jnp.float32) * 0.01

    out = multi_head_attention(x, wq, wk, wv, wo, bo)
    out = jax.block_until_ready(out)

    ref = reference(x, wq, wk, wv, wo, bo)
    assert out.shape == (B, T, C)
    # Kernel math is exact f32 elementwise; the only remaining divergence from
    # the HIGHEST-precision reference is the MXU pass-precision chosen for the
    # f32 matmuls (values are O(1), so 2e-2 abs covers bf16-pass rounding while
    # still catching any structural/semantic bug, which would be O(1)).
    max_err = float(jnp.max(jnp.abs(out - ref)))
    assert max_err < 2e-2, f"mismatch vs reference: max abs err = {max_err}"

    print("KERNEL_OK")
</pallas_src>

<mosaic_0001>
module attributes {stable_mosaic.version = 11 : i64} {
  func.func @_mha_kernel(%arg0: memref<2x8x32xf32, #tpu.memory_space<vmem>>, %arg1: memref<32x96xf32, #tpu.memory_space<vmem>>, %arg2: memref<32x32xf32, #tpu.memory_space<vmem>>, %arg3: memref<1x32xf32, #tpu.memory_space<vmem>>, %arg4: memref<2x8x32xf32, #tpu.memory_space<vmem>>) attributes {dimension_semantics = [], scalar_prefetch = 0 : i64, scratch_operands = 0 : i64, tpu.core_type = #tpu.core_type<tc>} {
    %c0 = arith.constant 0 : index
    %c0_0 = arith.constant 0 : index
    %c0_1 = arith.constant 0 : index
    %0 = vector.load %arg0[%c0, %c0_0, %c0_1] : memref<2x8x32xf32, #tpu.memory_space<vmem>>, vector<2x8x32xf32>
    %1 = vector.shape_cast %0 : vector<2x8x32xf32> to vector<16x32xf32>
    %c0_2 = arith.constant 0 : index
    %c0_3 = arith.constant 0 : index
    %2 = vector.load %arg1[%c0_2, %c0_3] : memref<32x96xf32, #tpu.memory_space<vmem>>, vector<32x96xf32>
    %cst = arith.constant dense<0.000000e+00> : vector<16x96xf32>
    %3 = tpu.matmul %1, %2, %cst {dimension_numbers = #tpu.dot_dimension_numbers<[1], [0], [0], [1], [0, 0, 1, 1], [], []>} : vector<16x32xf32>, vector<32x96xf32>, vector<16x96xf32> -> vector<16x96xf32>
    %4 = vector.extract_strided_slice %3 {offsets = [0, 0], sizes = [16, 8], strides = [1, 1]} : vector<16x96xf32> to vector<16x8xf32>
    %5 = vector.shape_cast %4 : vector<16x8xf32> to vector<2x8x8xf32>
    %6 = vector.extract_strided_slice %3 {offsets = [0, 8], sizes = [16, 8], strides = [1, 1]} : vector<16x96xf32> to vector<16x8xf32>
    %7 = vector.shape_cast %6 : vector<16x8xf32> to vector<2x8x8xf32>
    %8 = vector.extract_strided_slice %3 {offsets = [0, 16], sizes = [16, 8], strides = [1, 1]} : vector<16x96xf32> to vector<16x8xf32>
    %9 = vector.shape_cast %8 : vector<16x8xf32> to vector<2x8x8xf32>
    %10 = vector.extract_strided_slice %3 {offsets = [0, 24], sizes = [16, 8], strides = [1, 1]} : vector<16x96xf32> to vector<16x8xf32>
    %11 = vector.shape_cast %10 : vector<16x8xf32> to vector<2x8x8xf32>
    %12 = tpu.concatenate %5, %7, %9, %11 in 0 : vector<2x8x8xf32>, vector<2x8x8xf32>, vector<2x8x8xf32>, vector<2x8x8xf32> -> vector<8x8x8xf32>
    %13 = vector.extract_strided_slice %3 {offsets = [0, 32], sizes = [16, 8], strides = [1, 1]} : vector<16x96xf32> to vector<16x8xf32>
    %14 = vector.shape_cast %13 : vector<16x8xf32> to vector<2x8x8xf32>
    %15 = vector.extract_strided_slice %3 {offsets = [0, 40], sizes = [16, 8], strides = [1, 1]} : vector<16x96xf32> to vector<16x8xf32>
    %16 = vector.shape_cast %15 : vector<16x8xf32> to vector<2x8x8xf32>
    %17 = vector.extract_strided_slice %3 {offsets = [0, 48], sizes = [16, 8], strides = [1, 1]} : vector<16x96xf32> to vector<16x8xf32>
    %18 = vector.shape_cast %17 : vector<16x8xf32> to vector<2x8x8xf32>
    %19 = vector.extract_strided_slice %3 {offsets = [0, 56], sizes = [16, 8], strides = [1, 1]} : vector<16x96xf32> to vector<16x8xf32>
    %20 = vector.shape_cast %19 : vector<16x8xf32> to vector<2x8x8xf32>
    %21 = tpu.concatenate %14, %16, %18, %20 in 0 : vector<2x8x8xf32>, vector<2x8x8xf32>, vector<2x8x8xf32>, vector<2x8x8xf32> -> vector<8x8x8xf32>
    %22 = vector.extract_strided_slice %3 {offsets = [0, 64], sizes = [16, 8], strides = [1, 1]} : vector<16x96xf32> to vector<16x8xf32>
    %23 = vector.shape_cast %22 : vector<16x8xf32> to vector<2x8x8xf32>
    %24 = vector.extract_strided_slice %3 {offsets = [0, 72], sizes = [16, 8], strides = [1, 1]} : vector<16x96xf32> to vector<16x8xf32>
    %25 = vector.shape_cast %24 : vector<16x8xf32> to vector<2x8x8xf32>
    %26 = vector.extract_strided_slice %3 {offsets = [0, 80], sizes = [16, 8], strides = [1, 1]} : vector<16x96xf32> to vector<16x8xf32>
    %27 = vector.shape_cast %26 : vector<16x8xf32> to vector<2x8x8xf32>
    %28 = vector.extract_strided_slice %3 {offsets = [0, 88], sizes = [16, 8], strides = [1, 1]} : vector<16x96xf32> to vector<16x8xf32>
    %29 = vector.shape_cast %28 : vector<16x8xf32> to vector<2x8x8xf32>
    %30 = tpu.concatenate %23, %25, %27, %29 in 0 : vector<2x8x8xf32>, vector<2x8x8xf32>, vector<2x8x8xf32>, vector<2x8x8xf32> -> vector<8x8x8xf32>
    %31 = tpu.iota {dimensions = array<i32: 0>} : vector<8x8xi32>
    %32 = tpu.iota {dimensions = array<i32: 1>} : vector<8x8xi32>
    %33 = arith.cmpi sge, %31, %32 : vector<8x8xi32>
    %34 = vector.shape_cast %33 : vector<8x8xi1> to vector<1x8x8xi1>
    "tpu.trace_start"() <{level = 10 : i32, message = "zqd,zkd->zqk"}> : () -> ()
    %cst_4 = arith.constant dense<0.000000e+00> : vector<8x8x8xf32>
    %35 = tpu.matmul %12, %21, %cst_4 {dimension_numbers = #tpu.dot_dimension_numbers<[2], [2], [1], [1], [0, 0, 0, 1, 1, 1], [0], [0]>} : vector<8x8x8xf32>, vector<8x8x8xf32>, vector<8x8x8xf32> -> vector<8x8x8xf32>
    "tpu.trace_stop"() : () -> ()
    %cst_5 = arith.constant 0.353553385 : f32
    %36 = vector.broadcast %cst_5 : f32 to vector<8x8x8xf32>
    %37 = arith.mulf %35, %36 : vector<8x8x8xf32>
    %cst_6 = arith.constant 0xFF800000 : f32
    %38 = vector.shape_cast %34 : vector<1x8x8xi1> to vector<1x8x8xi1>
    %39 = vector.broadcast %38 : vector<1x8x8xi1> to vector<8x8x8xi1>
    %40 = vector.broadcast %cst_6 : f32 to vector<8x8x8xf32>
    %41 = arith.select %39, %37, %40 : vector<8x8x8xi1>, vector<8x8x8xf32>
    %cst_7 = arith.constant dense<0xFF800000> : vector<8x8xf32>
    %42 = vector.multi_reduction <maximumf>, %41, %cst_7 [2] : vector<8x8x8xf32> to vector<8x8xf32>
    %43 = vector.shape_cast %42 : vector<8x8xf32> to vector<8x8x1xf32>
    %44 = vector.broadcast %43 : vector<8x8x1xf32> to vector<8x8x8xf32>
    %45 = arith.subf %41, %44 : vector<8x8x8xf32>
    %46 = math.exp %45 : vector<8x8x8xf32>
    %cst_8 = arith.constant dense<0.000000e+00> : vector<8x8xf32>
    %47 = vector.multi_reduction <add>, %46, %cst_8 [2] : vector<8x8x8xf32> to vector<8x8xf32>
    %48 = vector.shape_cast %47 : vector<8x8xf32> to vector<8x8x1xf32>
    %49 = vector.broadcast %48 : vector<8x8x1xf32> to vector<8x8x8xf32>
    %50 = arith.divf %46, %49 : vector<8x8x8xf32>
    "tpu.trace_start"() <{level = 10 : i32, message = "zqk,zkd->zqd"}> : () -> ()
    %cst_9 = arith.constant dense<0.000000e+00> : vector<8x8x8xf32>
    %51 = tpu.matmul %50, %30, %cst_9 {dimension_numbers = #tpu.dot_dimension_numbers<[2], [1], [1], [2], [0, 0, 0, 1, 1, 2], [0], [0]>} : vector<8x8x8xf32>, vector<8x8x8xf32>, vector<8x8x8xf32> -> vector<8x8x8xf32>
    "tpu.trace_stop"() : () -> ()
    %52 = vector.extract_strided_slice %51 {offsets = [0, 0, 0], sizes = [2, 8, 8], strides = [1, 1, 1]} : vector<8x8x8xf32> to vector<2x8x8xf32>
    %53 = vector.shape_cast %52 : vector<2x8x8xf32> to vector<16x8xf32>
    %54 = vector.extract_strided_slice %51 {offsets = [2, 0, 0], sizes = [2, 8, 8], strides = [1, 1, 1]} : vector<8x8x8xf32> to vector<2x8x8xf32>
    %55 = vector.shape_cast %54 : vector<2x8x8xf32> to vector<16x8xf32>
    %56 = vector.extract_strided_slice %51 {offsets = [4, 0, 0], sizes = [2, 8, 8], strides = [1, 1, 1]} : vector<8x8x8xf32> to vector<2x8x8xf32>
    %57 = vector.shape_cast %56 : vector<2x8x8xf32> to vector<16x8xf32>
    %58 = vector.extract_strided_slice %51 {offsets = [6, 0, 0], sizes = [2, 8, 8], strides = [1, 1, 1]} : vector<8x8x8xf32> to vector<2x8x8xf32>
    %59 = vector.shape_cast %58 : vector<2x8x8xf32> to vector<16x8xf32>
    %60 = tpu.concatenate %53, %55, %57, %59 in 1 : vector<16x8xf32>, vector<16x8xf32>, vector<16x8xf32>, vector<16x8xf32> -> vector<16x32xf32>
    %c0_10 = arith.constant 0 : index
    %c0_11 = arith.constant 0 : index
    %61 = vector.load %arg2[%c0_10, %c0_11] : memref<32x32xf32, #tpu.memory_space<vmem>>, vector<32x32xf32>
    %cst_12 = arith.constant dense<0.000000e+00> : vector<16x32xf32>
    %62 = tpu.matmul %60, %61, %cst_12 {dimension_numbers = #tpu.dot_dimension_numbers<[1], [0], [0], [1], [0, 0, 1, 1], [], []>} : vector<16x32xf32>, vector<32x32xf32>, vector<16x32xf32> -> vector<16x32xf32>
    %c0_13 = arith.constant 0 : index
    %c0_14 = arith.constant 0 : index
    %63 = vector.load %arg3[%c0_13, %c0_14] : memref<1x32xf32, #tpu.memory_space<vmem>>, vector<1x32xf32>
    %64 = vector.broadcast %63 : vector<1x32xf32> to vector<16x32xf32>
    %65 = arith.addf %62, %64 : vector<16x32xf32>
    %66 = vector.shape_cast %65 : vector<16x32xf32> to vector<2x8x32xf32>
    %c0_15 = arith.constant 0 : index
    %c0_16 = arith.constant 0 : index
    %c0_17 = arith.constant 0 : index
    %67 = vector.load %arg4[%c0_15, %c0_16, %c0_17] : memref<2x8x32xf32, #tpu.memory_space<vmem>>, vector<2x8x32xf32>
    tpu.vector_store %arg4[%c0_15, %c0_16, %c0_17], %66 {strides = array<i32>} : memref<2x8x32xf32, #tpu.memory_space<vmem>>, vector<2x8x32xf32>,
    return
  }
}

</mosaic_0001>

<llo_original>
// kernel: tpu_custom_call.1
$region0: #{tpu_custom_call.1}
  #allocation0 [shape = 'u32[]', space=smem, size = 0x4, offset = 0x4, fixed_abs, tag = 'smem constant byte address 0x4 - core index']
  #allocation1 [shape = 'u32[144,128]{1,0:T(1,128)}', space=vmem, size = 0x12000, scoped, tag = 'internal scratch']
  %s0 = inlined_call_operand.hbm [shape: f32[2,8,32], index: 0, kind: input, shape index: {}]
  %s1 = inlined_call_operand.hbm [shape: f32[32,96], index: 1, kind: input, shape index: {}]
  %s2 = inlined_call_operand.hbm [shape: f32[32,32], index: 2, kind: input, shape index: {}]
  %s3 = inlined_call_operand.vmem [shape: f32[1,32], index: 3, kind: input, shape index: {}]
  %s4 = inlined_call_operand.hbm [shape: f32[2,8,32], index: 4, kind: output, shape index: {}]
  %s5 = sld [smem:[#allocation0]]
  $region38: #{tpu_custom_call.1} parent=0
    _
  %s7 = ssub.s32 1, %s5
  %s8 = scalar_select 0, %s7, %s5
  $region1: #{tpu_custom_call.1} parent=0
    #allocation2 [shape = 'u8[8192]{0}', space=vmem, size = 0x2000, scoped, tag = 'input window, operand 0, single buffered']
    #allocation3 [shape = 's32[1]{0}', space=sflag, size = 0x4, scoped, tag = 'scoped memory for tpu_custom_call.1']
    #allocation4 [shape = 's32[1]{0}', space=sflag, size = 0x4, scoped, tag = 'scoped memory for tpu_custom_call.1']
    #allocation5 [shape = 'u8[16384]{0}', space=vmem, size = 0x4000, scoped, tag = 'input window, operand 1, single buffered']
    #allocation6 [shape = 's32[1]{0}', space=sflag, size = 0x4, scoped, tag = 'scoped memory for tpu_custom_call.1']
    #allocation7 [shape = 'u8[16384]{0}', space=vmem, size = 0x4000, scoped, tag = 'input window, operand 2, single buffered']
    #allocation8 [shape = 'u8[8192]{0}', space=vmem, size = 0x2000, scoped, tag = 'output window, operand 0, single buffered']
    %9 = vsyncpa [#allocation3], 0
    %10 = vsyncpa [#allocation6], 0
    %11 = vsyncpa [#allocation4], 0
    // Predicated region
    $region2: #{tpu_custom_call.1} parent=1 // pred_check
      _
    $region3: #{tpu_custom_call.1} parent=1 // pred_check_branch
      %13 = sbr.rel (0) target = $region5
    $region4: #{tpu_custom_call.1} parent=1 // pred_region
      %s15 = ssub.s32 256, 256
      %16 = vsyncadd [#allocation3], %s15
      %s17 = sshll.u32 [#allocation2], 4
      %s18 = int_to_ptr.vmem [resolvable:$true] %s17
      %23 = dma.hbm_to_vmem [thread:$0]  %s0, 256, %s18, [#allocation3], 128, 128, 8
    $region5: #{tpu_custom_call.1} parent=1 // pred_fallthru
      _
    // Predicated region
    $region6: #{tpu_custom_call.1} parent=1 // pred_check
      _
    $region7: #{tpu_custom_call.1} parent=1 // pred_check_branch
      %25 = sbr.rel (0) target = $region9
    $region8: #{tpu_custom_call.1} parent=1 // pred_region
      %s27 = ssub.s32 512, 512
      %28 = vsyncadd [#allocation6], %s27
      %s29 = sshll.u32 [#allocation5], 4
      %s30 = int_to_ptr.vmem [resolvable:$true] %s29
      %35 = dma.hbm_to_vmem [thread:$0]  %s1, 512, %s30, [#allocation6], 128, 128, 8
    $region9: #{tpu_custom_call.1} parent=1 // pred_fallthru
      _
    // Predicated region
    $region10: #{tpu_custom_call.1} parent=1 // pred_check
      _
    $region11: #{tpu_custom_call.1} parent=1 // pred_check_branch
      %37 = sbr.rel (0) target = $region13
    $region12: #{tpu_custom_call.1} parent=1 // pred_region
      %s39 = ssub.s32 512, 512
      %40 = vsyncadd [#allocation6], %s39
      %s41 = sshll.u32 [#allocation7], 4
      %s42 = int_to_ptr.vmem [resolvable:$true] %s41
      %47 = dma.hbm_to_vmem [thread:$0]  %s2, 512, %s42, [#allocation6], 128, 128, 8
    $region13: #{tpu_custom_call.1} parent=1 // pred_fallthru
      _
    // Predicated region
    $region14: #{tpu_custom_call.1} parent=1 // pred_check
      _
    $region15: #{tpu_custom_call.1} parent=1 // pred_check_branch
      %49 = sbr.rel (0) target = $region17
    $region16: #{tpu_custom_call.1} parent=1 // pred_region
      _
    $region17: #{tpu_custom_call.1} parent=1 // pred_fallthru
      _
    // Predicated region
    $region18: #{tpu_custom_call.1} parent=1 // pred_check
      _
    $region19: #{tpu_custom_call.1} parent=1 // pred_check_branch
      %51 = sbr.rel (0) target = $region21
    $region20: #{tpu_custom_call.1} parent=1 // pred_region
      %52 = dma.done [#allocation3], 256
    $region21: #{tpu_custom_call.1} parent=1 // pred_fallthru
      _
    // Predicated region
    $region22: #{tpu_custom_call.1} parent=1 // pred_check
      _
    $region23: #{tpu_custom_call.1} parent=1 // pred_check_branch
      %54 = sbr.rel (0) target = $region25
    $region24: #{tpu_custom_call.1} parent=1 // pred_region
      %55 = dma.done [#allocation6], 512
    $region25: #{tpu_custom_call.1} parent=1 // pred_fallthru
      _
    // Predicated region
    $region26: #{tpu_custom_call.1} parent=1 // pred_check
      _
    $region27: #{tpu_custom_call.1} parent=1 // pred_check_branch
      %57 = sbr.rel (0) target = $region29
    $region28: #{tpu_custom_call.1} parent=1 // pred_region
      %58 = dma.done [#allocation6], 512
    $region29: #{tpu_custom_call.1} parent=1 // pred_fallthru
      _
    %v59 = vld [vmem:[#allocation2] sm:$0xff]
    %v60 = vld [vmem:[#allocation2 + $0x8] sm:$0xff]
    %v61 = vld [vmem:[#allocation5] sm:$0xff]
    %v62 = vld [vmem:[#allocation5 + $0x8] sm:$0xff]
    %v63 = vld [vmem:[#allocation5 + $0x10] sm:$0xff]
    %v64 = vld [vmem:[#allocation5 + $0x18] sm:$0xff]
    %vm65 = vcmask 261120
    %v67 = vsel %vm65, %v59, 0
    %v70 = vsel %vm65, %v60, 0
    %72 = vmatprep.subr.mxu0 0.0
    %73 = vmatpush1.msra.mxu0 %v61
    %74 = vmatprep.subr.mxu0 0.0
    %75 = vmatpush1.msra.mxu0 %v62
    %76 = vmatprep.subr.mxu0 0.0
    %77 = vmatpush1.msra.mxu0 %v63
    %78 = vmatprep.subr.mxu0 0.0
    %79 = vmatpush1.msra.mxu0 %v64
    %80 = vmatprep.subr.mxu0 0.0
    %81 = vmatpush1.msra.mxu0 0.0
    %82 = vmatprep.subr.mxu0 0.0
    %83 = vmatpush1.msra.mxu0 0.0
    %84 = vmatprep.subr.mxu0 0.0
    %85 = vmatpush1.msra.mxu0 0.0
    %86 = vmatprep.subr.mxu0 0.0
    %87 = vmatpush1.msra.mxu0 0.0
    %88 = vmatprep.subr.mxu0 0.0
    %89 = vmatpush1.msra.mxu0 0.0
    %90 = vmatprep.subr.mxu0 0.0
    %91 = vmatpush1.msra.mxu0 0.0
    %92 = vmatprep.subr.mxu0 0.0
    %93 = vmatpush1.msra.mxu0 0.0
    %94 = vmatprep.subr.mxu0 0.0
    %95 = vmatpush1.msra.mxu0 0.0
    %96 = vmatprep.subr.mxu0 0.0
    %97 = vmatpush1.msra.mxu0 0.0
    %98 = vmatprep.subr.mxu0 0.0
    %99 = vmatpush1.msra.mxu0 0.0
    %100 = vmatprep.subr.mxu0 0.0
    %101 = vmatpush1.msra.mxu0 0.0
    %102 = vmatprep.subr.mxu0 0.0
    %103 = vmatpush1.msra.mxu0 0.0
    %104 = vmatprep.subr.mxu0 0.0
    %105 = vmatpush1.msra.mxu0 0.0
    %106 = vmatprep.subr.mxu0 0.0
    %107 = vmatpush1.msra.mxu0 0.0
    %108 = vmatprep.subr.mxu0 0.0
    %109 = vmatpush1.msra.mxu0 0.0
    %110 = vmatprep.subr.mxu0 0.0
    %111 = vmatpush1.msra.mxu0 0.0
    %112 = vmatprep.subr.mxu0 0.0
    %113 = vmatpush1.msra.mxu0 0.0
    %114 = vmatprep.subr.mxu0 0.0
    %115 = vmatpush1.msra.mxu0 0.0
    %116 = vmatprep.subr.mxu0 0.0
    %117 = vmatpush1.msra.mxu0 0.0
    %118 = vmatprep.subr.mxu0 0.0
    %119 = vmatpush1.msra.mxu0 0.0
    %120 = vmatprep.subr.mxu0 0.0
    %121 = vmatpush1.msra.mxu0 0.0
    %122 = vmatprep.subr.mxu0 0.0
    %123 = vmatpush1.msra.mxu0 0.0
    %124 = vmatprep.subr.mxu0 0.0
    %125 = vmatpush1.msra.mxu0 0.0
    %126 = vmatprep.subr.mxu0 0.0
    %127 = vmatpush1.msra.mxu0 0.0
    %128 = vmatprep.subr.mxu0 0.0
    %129 = vmatpush1.msra.mxu0 0.0
    %130 = vmatprep.subr.mxu0 0.0
    %131 = vmatpush1.msra.mxu0 0.0
    %132 = vmatprep.subr.mxu0 0.0
    %133 = vmatpush1.msra.mxu0 0.0
    %134 = vmatprep.subr.mxu0 0.0
    %135 = vmatpush1.msra.mxu0 0.0
    %136 = vmatprep.mubr.f32.mxu0 0.0
    %137 = vmatmul.mubr.f32.gmra.mrb[0].mxu0 %v67
    %v138 = vpop.f32.mrb[0].mxu0
    %v139 = vadd.f32 0.0, %v138
    %v140 = vpop.f32.mrb[0].mxu0
    %141 = vmatprep.mubr.f32.mxu0 0.0
    %142 = vmatmul.mubr.f32.gmra.mrb[0].mxu0 %v70
    %v143 = vpop.f32.mrb[0].mxu0
    %v144 = vadd.f32 0.0, %v143
    %v145 = vpop.f32.mrb[0].mxu0
    %146 = vdwg.mxu0
    %149 = vrot.lane.b32.xlu0 %v139, 120
    %v150 = vpop.permute.xlu0 %149
    %151 = vrot.lane.b32.xlu0 %v144, 120
    %v152 = vpop.permute.xlu0 %151
    %153 = vrot.lane.b32.xlu0 %v139, 112
    %v154 = vpop.permute.xlu0 %153
    %155 = vrot.lane.b32.xlu0 %v144, 112
    %v156 = vpop.permute.xlu0 %155
    %157 = vrot.lane.b32.xlu0 %v139, 104
    %v158 = vpop.permute.xlu0 %157
    %159 = vrot.lane.b32.xlu0 %v144, 104
    %v160 = vpop.permute.xlu0 %159
    %v161 = vlaneseq
    %v162 = vshrl.u32 %v161, 7
    %v163 = vlaneseq
    %v164 = vand.u32 %v163, 127
    %vm165 = vcmp.ge.s32.totalorder %v162, %v164
    %166 = vrot.lane.b32.xlu0 %v139, 96
    %v167 = vpop.permute.xlu0 %166
    %vm168 = vcmask 64512
    %v169 = vsel %vm168, %v139, 0
    %v171 = vsel %vm168, %v167, 0
    %173 = vmatprep.subr.mxu0 0.0
    %174 = vmatpush1.xpose.msra.mxu0 %v171
    %175 = vmatprep.subr.mxu0 0.0
    %176 = vmatpush1.xpose.msra.mxu0 0.0
    %177 = vmatprep.subr.mxu0 0.0
    %178 = vmatpush1.xpose.msra.mxu0 0.0
    %179 = vmatprep.subr.mxu0 0.0
    %180 = vmatpush1.xpose.msra.mxu0 0.0
    %181 = vmatprep.subr.mxu0 0.0
    %182 = vmatpush1.xpose.msra.mxu0 0.0
    %183 = vmatprep.subr.mxu0 0.0
    %184 = vmatpush1.xpose.msra.mxu0 0.0
    %185 = vmatprep.subr.mxu0 0.0
    %186 = vmatpush1.xpose.msra.mxu0 0.0
    %187 = vmatprep.subr.mxu0 0.0
    %188 = vmatpush1.xpose.msra.mxu0 0.0
    %189 = vmatprep.subr.mxu0 0.0
    %190 = vmatpush1.xpose.msra.mxu0 0.0
    %191 = vmatprep.subr.mxu0 0.0
    %192 = vmatpush1.xpose.msra.mxu0 0.0
    %193 = vmatprep.subr.mxu0 0.0
    %194 = vmatpush1.xpose.msra.mxu0 0.0
    %195 = vmatprep.subr.mxu0 0.0
    %196 = vmatpush1.xpose.msra.mxu0 0.0
    %197 = vmatprep.subr.mxu0 0.0
    %198 = vmatpush1.xpose.msra.mxu0 0.0
    %199 = vmatprep.subr.mxu0 0.0
    %200 = vmatpush1.xpose.msra.mxu0 0.0
    %201 = vmatprep.subr.mxu0 0.0
    %202 = vmatpush1.xpose.msra.mxu0 0.0
    %203 = vmatprep.subr.mxu0 0.0
    %204 = vmatpush1.xpose.msra.mxu0 0.0
    %205 = vmatprep.subr.mxu0 0.0
    %206 = vmatpush1.xpose.msra.mxu0 0.0
    %207 = vmatprep.subr.mxu0 0.0
    %208 = vmatpush1.xpose.msra.mxu0 0.0
    %209 = vmatprep.subr.mxu0 0.0
    %210 = vmatpush1.xpose.msra.mxu0 0.0
    %211 = vmatprep.subr.mxu0 0.0
    %212 = vmatpush1.xpose.msra.mxu0 0.0
    %213 = vmatprep.subr.mxu0 0.0
    %214 = vmatpush1.xpose.msra.mxu0 0.0
    %215 = vmatprep.subr.mxu0 0.0
    %216 = vmatpush1.xpose.msra.mxu0 0.0
    %217 = vmatprep.subr.mxu0 0.0
    %218 = vmatpush1.xpose.msra.mxu0 0.0
    %219 = vmatprep.subr.mxu0 0.0
    %220 = vmatpush1.xpose.msra.mxu0 0.0
    %221 = vmatprep.subr.mxu0 0.0
    %222 = vmatpush1.xpose.msra.mxu0 0.0
    %223 = vmatprep.subr.mxu0 0.0
    %224 = vmatpush1.xpose.msra.mxu0 0.0
    %225 = vmatprep.subr.mxu0 0.0
    %226 = vmatpush1.xpose.msra.mxu0 0.0
    %227 = vmatprep.subr.mxu0 0.0
    %228 = vmatpush1.xpose.msra.mxu0 0.0
    %229 = vmatprep.subr.mxu0 0.0
    %230 = vmatpush1.xpose.msra.mxu0 0.0
    %231 = vmatprep.subr.mxu0 0.0
    %232 = vmatpush1.xpose.msra.mxu0 0.0
    %233 = vmatprep.subr.mxu0 0.0
    %234 = vmatpush1.xpose.msra.mxu0 0.0
    %235 = vmatprep.subr.mxu0 0.0
    %236 = vmatpush1.xpose.msra.mxu0 0.0
    %237 = vmatprep.mubr.f32.mxu0 0.0
    %238 = vmatmul.mubr.f32.gmra.mrb[0].mxu0 %v169
    %v239 = vpop.f32.mrb[0].mxu0
    %v240 = vadd.f32 0.0, %v239
    %v241 = vpop.f32.mrb[0].mxu0
    %242 = vdwg.mxu0
    %243 = vrot.lane.b32.xlu0 %v144, 96
    %v244 = vpop.permute.xlu0 %243
    %v245 = vsel %vm168, %v144, 0
    %v247 = vsel %vm168, %v244, 0
    %249 = vmatprep.subr.mxu0 0.0
    %250 = vmatpush1.xpose.msra.mxu0 %v247
    %251 = vmatprep.subr.mxu0 0.0
    %252 = vmatpush1.xpose.msra.mxu0 0.0
    %253 = vmatprep.subr.mxu0 0.0
    %254 = vmatpush1.xpose.msra.mxu0 0.0
    %255 = vmatprep.subr.mxu0 0.0
    %256 = vmatpush1.xpose.msra.mxu0 0.0
    %257 = vmatprep.subr.mxu0 0.0
    %258 = vmatpush1.xpose.msra.mxu0 0.0
    %259 = vmatprep.subr.mxu0 0.0
    %260 = vmatpush1.xpose.msra.mxu0 0.0
    %261 = vmatprep.subr.mxu0 0.0
    %262 = vmatpush1.xpose.msra.mxu0 0.0
    %263 = vmatprep.subr.mxu0 0.0
    %264 = vmatpush1.xpose.msra.mxu0 0.0
    %265 = vmatprep.subr.mxu0 0.0
    %266 = vmatpush1.xpose.msra.mxu0 0.0
    %267 = vmatprep.subr.mxu0 0.0
    %268 = vmatpush1.xpose.msra.mxu0 0.0
    %269 = vmatprep.subr.mxu0 0.0
    %270 = vmatpush1.xpose.msra.mxu0 0.0
    %271 = vmatprep.subr.mxu0 0.0
    %272 = vmatpush1.xpose.msra.mxu0 0.0
    %273 = vmatprep.subr.mxu0 0.0
    %274 = vmatpush1.xpose.msra.mxu0 0.0
    %275 = vmatprep.subr.mxu0 0.0
    %276 = vmatpush1.xpose.msra.mxu0 0.0
    %277 = vmatprep.subr.mxu0 0.0
    %278 = vmatpush1.xpose.msra.mxu0 0.0
    %279 = vmatprep.subr.mxu0 0.0
    %280 = vmatpush1.xpose.msra.mxu0 0.0
    %281 = vmatprep.subr.mxu0 0.0
    %282 = vmatpush1.xpose.msra.mxu0 0.0
    %283 = vmatprep.subr.mxu0 0.0
    %284 = vmatpush1.xpose.msra.mxu0 0.0
    %285 = vmatprep.subr.mxu0 0.0
    %286 = vmatpush1.xpose.msra.mxu0 0.0
    %287 = vmatprep.subr.mxu0 0.0
    %288 = vmatpush1.xpose.msra.mxu0 0.0
    %289 = vmatprep.subr.mxu0 0.0
    %290 = vmatpush1.xpose.msra.mxu0 0.0
    %291 = vmatprep.subr.mxu0 0.0
    %292 = vmatpush1.xpose.msra.mxu0 0.0
    %293 = vmatprep.subr.mxu0 0.0
    %294 = vmatpush1.xpose.msra.mxu0 0.0
    %295 = vmatprep.subr.mxu0 0.0
    %296 = vmatpush1.xpose.msra.mxu0 0.0
    %297 = vmatprep.subr.mxu0 0.0
    %298 = vmatpush1.xpose.msra.mxu0 0.0
    %299 = vmatprep.subr.mxu0 0.0
    %300 = vmatpush1.xpose.msra.mxu0 0.0
    %301 = vmatprep.subr.mxu0 0.0
    %302 = vmatpush1.xpose.msra.mxu0 0.0
    %303 = vmatprep.subr.mxu0 0.0
    %304 = vmatpush1.xpose.msra.mxu0 0.0
    %305 = vmatprep.subr.mxu0 0.0
    %306 = vmatpush1.xpose.msra.mxu0 0.0
    %307 = vmatprep.subr.mxu0 0.0
    %308 = vmatpush1.xpose.msra.mxu0 0.0
    %309 = vmatprep.subr.mxu0 0.0
    %310 = vmatpush1.xpose.msra.mxu0 0.0
    %311 = vmatprep.subr.mxu0 0.0
    %312 = vmatpush1.xpose.msra.mxu0 0.0
    %313 = vmatprep.mubr.f32.mxu0 0.0
    %314 = vmatmul.mubr.f32.gmra.mrb[0].mxu0 %v245
    %v315 = vpop.f32.mrb[0].mxu0
    %v316 = vadd.f32 0.0, %v315
    %v317 = vpop.f32.mrb[0].mxu0
    %318 = vdwg.mxu0
    %319 = vrot.lane.b32.xlu0 %v150, 96
    %v320 = vpop.permute.xlu0 %319
    %v321 = vsel %vm168, %v150, 0
    %v323 = vsel %vm168, %v320, 0
    %325 = vmatprep.subr.mxu0 0.0
    %326 = vmatpush1.xpose.msra.mxu0 %v323
    %327 = vmatprep.subr.mxu0 0.0
    %328 = vmatpush1.xpose.msra.mxu0 0.0
    %329 = vmatprep.subr.mxu0 0.0
    %330 = vmatpush1.xpose.msra.mxu0 0.0
    %331 = vmatprep.subr.mxu0 0.0
    %332 = vmatpush1.xpose.msra.mxu0 0.0
    %333 = vmatprep.subr.mxu0 0.0
    %334 = vmatpush1.xpose.msra.mxu0 0.0
    %335 = vmatprep.subr.mxu0 0.0
    %336 = vmatpush1.xpose.msra.mxu0 0.0
    %337 = vmatprep.subr.mxu0 0.0
    %338 = vmatpush1.xpose.msra.mxu0 0.0
    %339 = vmatprep.subr.mxu0 0.0
    %340 = vmatpush1.xpose.msra.mxu0 0.0
    %341 = vmatprep.subr.mxu0 0.0
    %342 = vmatpush1.xpose.msra.mxu0 0.0
    %343 = vmatprep.subr.mxu0 0.0
    %344 = vmatpush1.xpose.msra.mxu0 0.0
    %345 = vmatprep.subr.mxu0 0.0
    %346 = vmatpush1.xpose.msra.mxu0 0.0
    %347 = vmatprep.subr.mxu0 0.0
    %348 = vmatpush1.xpose.msra.mxu0 0.0
    %349 = vmatprep.subr.mxu0 0.0
    %350 = vmatpush1.xpose.msra.mxu0 0.0
    %351 = vmatprep.subr.mxu0 0.0
    %352 = vmatpush1.xpose.msra.mxu0 0.0
    %353 = vmatprep.subr.mxu0 0.0
    %354 = vmatpush1.xpose.msra.mxu0 0.0
    %355 = vmatprep.subr.mxu0 0.0
    %356 = vmatpush1.xpose.msra.mxu0 0.0
    %357 = vmatprep.subr.mxu0 0.0
    %358 = vmatpush1.xpose.msra.mxu0 0.0
    %359 = vmatprep.subr.mxu0 0.0
    %360 = vmatpush1.xpose.msra.mxu0 0.0
    %361 = vmatprep.subr.mxu0 0.0
    %362 = vmatpush1.xpose.msra.mxu0 0.0
    %363 = vmatprep.subr.mxu0 0.0
    %364 = vmatpush1.xpose.msra.mxu0 0.0
    %365 = vmatprep.subr.mxu0 0.0
    %366 = vmatpush1.xpose.msra.mxu0 0.0
    %367 = vmatprep.subr.mxu0 0.0
    %368 = vmatpush1.xpose.msra.mxu0 0.0
    %369 = vmatprep.subr.mxu0 0.0
    %370 = vmatpush1.xpose.msra.mxu0 0.0
    %371 = vmatprep.subr.mxu0 0.0
    %372 = vmatpush1.xpose.msra.mxu0 0.0
    %373 = vmatprep.subr.mxu0 0.0
    %374 = vmatpush1.xpose.msra.mxu0 0.0
    %375 = vmatprep.subr.mxu0 0.0
    %376 = vmatpush1.xpose.msra.mxu0 0.0
    %377 = vmatprep.subr.mxu0 0.0
    %378 = vmatpush1.xpose.msra.mxu0 0.0
    %379 = vmatprep.subr.mxu0 0.0
    %380 = vmatpush1.xpose.msra.mxu0 0.0
    %381 = vmatprep.subr.mxu0 0.0
    %382 = vmatpush1.xpose.msra.mxu0 0.0
    %383 = vmatprep.subr.mxu0 0.0
    %384 = vmatpush1.xpose.msra.mxu0 0.0
    %385 = vmatprep.subr.mxu0 0.0
    %386 = vmatpush1.xpose.msra.mxu0 0.0
    %387 = vmatprep.subr.mxu0 0.0
    %388 = vmatpush1.xpose.msra.mxu0 0.0
    %389 = vmatprep.mubr.f32.mxu0 0.0
    %390 = vmatmul.mubr.f32.gmra.mrb[0].mxu0 %v321
    %v391 = vpop.f32.mrb[0].mxu0
    %v392 = vadd.f32 0.0, %v391
    %v393 = vpop.f32.mrb[0].mxu0
    %394 = vdwg.mxu0
    %395 = vrot.lane.b32.xlu0 %v152, 96
    %v396 = vpop.permute.xlu0 %395
    %v397 = vsel %vm168, %v152, 0
    %v399 = vsel %vm168, %v396, 0
    %401 = vmatprep.subr.mxu0 0.0
    %402 = vmatpush1.xpose.msra.mxu0 %v399
    %403 = vmatprep.subr.mxu0 0.0
    %404 = vmatpush1.xpose.msra.mxu0 0.0
    %405 = vmatprep.subr.mxu0 0.0
    %406 = vmatpush1.xpose.msra.mxu0 0.0
    %407 = vmatprep.subr.mxu0 0.0
    %408 = vmatpush1.xpose.msra.mxu0 0.0
    %409 = vmatprep.subr.mxu0 0.0
    %410 = vmatpush1.xpose.msra.mxu0 0.0
    %411 = vmatprep.subr.mxu0 0.0
    %412 = vmatpush1.xpose.msra.mxu0 0.0
    %413 = vmatprep.subr.mxu0 0.0
    %414 = vmatpush1.xpose.msra.mxu0 0.0
    %415 = vmatprep.subr.mxu0 0.0
    %416 = vmatpush1.xpose.msra.mxu0 0.0
    %417 = vmatprep.subr.mxu0 0.0
    %418 = vmatpush1.xpose.msra.mxu0 0.0
    %419 = vmatprep.subr.mxu0 0.0
    %420 = vmatpush1.xpose.msra.mxu0 0.0
    %421 = vmatprep.subr.mxu0 0.0
    %422 = vmatpush1.xpose.msra.mxu0 0.0
    %423 = vmatprep.subr.mxu0 0.0
    %424 = vmatpush1.xpose.msra.mxu0 0.0
    %425 = vmatprep.subr.mxu0 0.0
    %426 = vmatpush1.xpose.msra.mxu0 0.0
    %427 = vmatprep.subr.mxu0 0.0
    %428 = vmatpush1.xpose.msra.mxu0 0.0
    %429 = vmatprep.subr.mxu0 0.0
    %430 = vmatpush1.xpose.msra.mxu0 0.0
    %431 = vmatprep.subr.mxu0 0.0
    %432 = vmatpush1.xpose.msra.mxu0 0.0
    %433 = vmatprep.subr.mxu0 0.0
    %434 = vmatpush1.xpose.msra.mxu0 0.0
    %435 = vmatprep.subr.mxu0 0.0
    %436 = vmatpush1.xpose.msra.mxu0 0.0
    %437 = vmatprep.subr.mxu0 0.0
    %438 = vmatpush1.xpose.msra.mxu0 0.0
    %439 = vmatprep.subr.mxu0 0.0
    %440 = vmatpush1.xpose.msra.mxu0 0.0
    %441 = vmatprep.subr.mxu0 0.0
    %442 = vmatpush1.xpose.msra.mxu0 0.0
    %443 = vmatprep.subr.mxu0 0.0
    %444 = vmatpush1.xpose.msra.mxu0 0.0
    %445 = vmatprep.subr.mxu0 0.0
    %446 = vmatpush1.xpose.msra.mxu0 0.0
    %447 = vmatprep.subr.mxu0 0.0
    %448 = vmatpush1.xpose.msra.mxu0 0.0
    %449 = vmatprep.subr.mxu0 0.0
    %450 = vmatpush1.xpose.msra.mxu0 0.0
    %451 = vmatprep.subr.mxu0 0.0
    %452 = vmatpush1.xpose.msra.mxu0 0.0
    %453 = vmatprep.subr.mxu0 0.0
    %454 = vmatpush1.xpose.msra.mxu0 0.0
    %455 = vmatprep.subr.mxu0 0.0
    %456 = vmatpush1.xpose.msra.mxu0 0.0
    %457 = vmatprep.subr.mxu0 0.0
    %458 = vmatpush1.xpose.msra.mxu0 0.0
    %459 = vmatprep.subr.mxu0 0.0
    %460 = vmatpush1.xpose.msra.mxu0 0.0
    %461 = vmatprep.subr.mxu0 0.0
    %462 = vmatpush1.xpose.msra.mxu0 0.0
    %463 = vmatprep.subr.mxu0 0.0
    %464 = vmatpush1.xpose.msra.mxu0 0.0
    %465 = vmatprep.mubr.f32.mxu0 0.0
    %466 = vmatmul.mubr.f32.gmra.mrb[0].mxu0 %v397
    %v467 = vpop.f32.mrb[0].mxu0
    %v468 = vadd.f32 0.0, %v467
    %v469 = vpop.f32.mrb[0].mxu0
    %470 = vdwg.mxu0
    %471 = vrot.lane.b32.xlu0 %v154, 96
    %v472 = vpop.permute.xlu0 %471
    %v473 = vsel %vm168, %v154, 0
    %v475 = vsel %vm168, %v472, 0
    %477 = vmatprep.subr.mxu0 0.0
    %478 = vmatpush1.xpose.msra.mxu0 %v475
    %479 = vmatprep.subr.mxu0 0.0
    %480 = vmatpush1.xpose.msra.mxu0 0.0
    %481 = vmatprep.subr.mxu0 0.0
    %482 = vmatpush1.xpose.msra.mxu0 0.0
    %483 = vmatprep.subr.mxu0 0.0
    %484 = vmatpush1.xpose.msra.mxu0 0.0
    %485 = vmatprep.subr.mxu0 0.0
    %486 = vmatpush1.xpose.msra.mxu0 0.0
    %487 = vmatprep.subr.mxu0 0.0
    %488 = vmatpush1.xpose.msra.mxu0 0.0
    %489 = vmatprep.subr.mxu0 0.0
    %490 = vmatpush1.xpose.msra.mxu0 0.0
    %491 = vmatprep.subr.mxu0 0.0
    %492 = vmatpush1.xpose.msra.mxu0 0.0
    %493 = vmatprep.subr.mxu0 0.0
    %494 = vmatpush1.xpose.msra.mxu0 0.0
    %495 = vmatprep.subr.mxu0 0.0
    %496 = vmatpush1.xpose.msra.mxu0 0.0
    %497 = vmatprep.subr.mxu0 0.0
    %498 = vmatpush1.xpose.msra.mxu0 0.0
    %499 = vmatprep.subr.mxu0 0.0
    %500 = vmatpush1.xpose.msra.mxu0 0.0
    %501 = vmatprep.subr.mxu0 0.0
    %502 = vmatpush1.xpose.msra.mxu0 0.0
    %503 = vmatprep.subr.mxu0 0.0
    %504 = vmatpush1.xpose.msra.mxu0 0.0
    %505 = vmatprep.subr.mxu0 0.0
    %506 = vmatpush1.xpose.msra.mxu0 0.0
    %507 = vmatprep.subr.mxu0 0.0
    %508 = vmatpush1.xpose.msra.mxu0 0.0
    %509 = vmatprep.subr.mxu0 0.0
    %510 = vmatpush1.xpose.msra.mxu0 0.0
    %511 = vmatprep.subr.mxu0 0.0
    %512 = vmatpush1.xpose.msra.mxu0 0.0
    %513 = vmatprep.subr.mxu0 0.0
    %514 = vmatpush1.xpose.msra.mxu0 0.0
    %515 = vmatprep.subr.mxu0 0.0
    %516 = vmatpush1.xpose.msra.mxu0 0.0
    %517 = vmatprep.subr.mxu0 0.0
    %518 = vmatpush1.xpose.msra.mxu0 0.0
    %519 = vmatprep.subr.mxu0 0.0
    %520 = vmatpush1.xpose.msra.mxu0 0.0
    %521 = vmatprep.subr.mxu0 0.0
    %522 = vmatpush1.xpose.msra.mxu0 0.0
    %523 = vmatprep.subr.mxu0 0.0
    %524 = vmatpush1.xpose.msra.mxu0 0.0
    %525 = vmatprep.subr.mxu0 0.0
    %526 = vmatpush1.xpose.msra.mxu0 0.0
    %527 = vmatprep.subr.mxu0 0.0
    %528 = vmatpush1.xpose.msra.mxu0 0.0
    %529 = vmatprep.subr.mxu0 0.0
    %530 = vmatpush1.xpose.msra.mxu0 0.0
    %531 = vmatprep.subr.mxu0 0.0
    %532 = vmatpush1.xpose.msra.mxu0 0.0
    %533 = vmatprep.subr.mxu0 0.0
    %534 = vmatpush1.xpose.msra.mxu0 0.0
    %535 = vmatprep.subr.mxu0 0.0
    %536 = vmatpush1.xpose.msra.mxu0 0.0
    %537 = vmatprep.subr.mxu0 0.0
    %538 = vmatpush1.xpose.msra.mxu0 0.0
    %539 = vmatprep.subr.mxu0 0.0
    %540 = vmatpush1.xpose.msra.mxu0 0.0
    %541 = vmatprep.mubr.f32.mxu0 0.0
    %542 = vmatmul.mubr.f32.gmra.mrb[0].mxu0 %v473
    %v543 = vpop.f32.mrb[0].mxu0
    %v544 = vadd.f32 0.0, %v543
    %v545 = vpop.f32.mrb[0].mxu0
    %546 = vdwg.mxu0
    %547 = vrot.lane.b32.xlu0 %v156, 96
    %v548 = vpop.permute.xlu0 %547
    %v549 = vsel %vm168, %v156, 0
    %v551 = vsel %vm168, %v548, 0
    %553 = vmatprep.subr.mxu0 0.0
    %554 = vmatpush1.xpose.msra.mxu0 %v551
    %555 = vmatprep.subr.mxu0 0.0
    %556 = vmatpush1.xpose.msra.mxu0 0.0
    %557 = vmatprep.subr.mxu0 0.0
    %558 = vmatpush1.xpose.msra.mxu0 0.0
    %559 = vmatprep.subr.mxu0 0.0
    %560 = vmatpush1.xpose.msra.mxu0 0.0
    %561 = vmatprep.subr.mxu0 0.0
    %562 = vmatpush1.xpose.msra.mxu0 0.0
    %563 = vmatprep.subr.mxu0 0.0
    %564 = vmatpush1.xpose.msra.mxu0 0.0
    %565 = vmatprep.subr.mxu0 0.0
    %566 = vmatpush1.xpose.msra.mxu0 0.0
    %567 = vmatprep.subr.mxu0 0.0
    %568 = vmatpush1.xpose.msra.mxu0 0.0
    %569 = vmatprep.subr.mxu0 0.0
    %570 = vmatpush1.xpose.msra.mxu0 0.0
    %571 = vmatprep.subr.mxu0 0.0
    %572 = vmatpush1.xpose.msra.mxu0 0.0
    %573 = vmatprep.subr.mxu0 0.0
    %574 = vmatpush1.xpose.msra.mxu0 0.0
    %575 = vmatprep.subr.mxu0 0.0
    %576 = vmatpush1.xpose.msra.mxu0 0.0
    %577 = vmatprep.subr.mxu0 0.0
    %578 = vmatpush1.xpose.msra.mxu0 0.0
    %579 = vmatprep.subr.mxu0 0.0
    %580 = vmatpush1.xpose.msra.mxu0 0.0
    %581 = vmatprep.subr.mxu0 0.0
    %582 = vmatpush1.xpose.msra.mxu0 0.0
    %583 = vmatprep.subr.mxu0 0.0
    %584 = vmatpush1.xpose.msra.mxu0 0.0
    %585 = vmatprep.subr.mxu0 0.0
    %586 = vmatpush1.xpose.msra.mxu0 0.0
    %587 = vmatprep.subr.mxu0 0.0
    %588 = vmatpush1.xpose.msra.mxu0 0.0
    %589 = vmatprep.subr.mxu0 0.0
    %590 = vmatpush1.xpose.msra.mxu0 0.0
    %591 = vmatprep.subr.mxu0 0.0
    %592 = vmatpush1.xpose.msra.mxu0 0.0
    %593 = vmatprep.subr.mxu0 0.0
    %594 = vmatpush1.xpose.msra.mxu0 0.0
    %595 = vmatprep.subr.mxu0 0.0
    %596 = vmatpush1.xpose.msra.mxu0 0.0
    %597 = vmatprep.subr.mxu0 0.0
    %598 = vmatpush1.xpose.msra.mxu0 0.0
    %599 = vmatprep.subr.mxu0 0.0
    %600 = vmatpush1.xpose.msra.mxu0 0.0
    %601 = vmatprep.subr.mxu0 0.0
    %602 = vmatpush1.xpose.msra.mxu0 0.0
    %603 = vmatprep.subr.mxu0 0.0
    %604 = vmatpush1.xpose.msra.mxu0 0.0
    %605 = vmatprep.subr.mxu0 0.0
    %606 = vmatpush1.xpose.msra.mxu0 0.0
    %607 = vmatprep.subr.mxu0 0.0
    %608 = vmatpush1.xpose.msra.mxu0 0.0
    %609 = vmatprep.subr.mxu0 0.0
    %610 = vmatpush1.xpose.msra.mxu0 0.0
    %611 = vmatprep.subr.mxu0 0.0
    %612 = vmatpush1.xpose.msra.mxu0 0.0
    %613 = vmatprep.subr.mxu0 0.0
    %614 = vmatpush1.xpose.msra.mxu0 0.0
    %615 = vmatprep.subr.mxu0 0.0
    %616 = vmatpush1.xpose.msra.mxu0 0.0
    %617 = vmatprep.mubr.f32.mxu0 0.0
    %618 = vmatmul.mubr.f32.gmra.mrb[0].mxu0 %v549
    %v619 = vpop.f32.mrb[0].mxu0
    %v620 = vadd.f32 0.0, %v619
    %v621 = vpop.f32.mrb[0].mxu0
    %622 = vdwg.mxu0
    %623 = vrot.lane.b32.xlu0 %v158, 96
    %v624 = vpop.permute.xlu0 %623
    %v625 = vsel %vm168, %v158, 0
    %v627 = vsel %vm168, %v624, 0
    %629 = vmatprep.subr.mxu0 0.0
    %630 = vmatpush1.xpose.msra.mxu0 %v627
    %631 = vmatprep.subr.mxu0 0.0
    %632 = vmatpush1.xpose.msra.mxu0 0.0
    %633 = vmatprep.subr.mxu0 0.0
    %634 = vmatpush1.xpose.msra.mxu0 0.0
    %635 = vmatprep.subr.mxu0 0.0
    %636 = vmatpush1.xpose.msra.mxu0 0.0
    %637 = vmatprep.subr.mxu0 0.0
    %638 = vmatpush1.xpose.msra.mxu0 0.0
    %639 = vmatprep.subr.mxu0 0.0
    %640 = vmatpush1.xpose.msra.mxu0 0.0
    %641 = vmatprep.subr.mxu0 0.0
    %642 = vmatpush1.xpose.msra.mxu0 0.0
    %643 = vmatprep.subr.mxu0 0.0
    %644 = vmatpush1.xpose.msra.mxu0 0.0
    %645 = vmatprep.subr.mxu0 0.0
    %646 = vmatpush1.xpose.msra.mxu0 0.0
    %647 = vmatprep.subr.mxu0 0.0
    %648 = vmatpush1.xpose.msra.mxu0 0.0
    %649 = vmatprep.subr.mxu0 0.0
    %650 = vmatpush1.xpose.msra.mxu0 0.0
    %651 = vmatprep.subr.mxu0 0.0
    %652 = vmatpush1.xpose.msra.mxu0 0.0
    %653 = vmatprep.subr.mxu0 0.0
    %654 = vmatpush1.xpose.msra.mxu0 0.0
    %655 = vmatprep.subr.mxu0 0.0
    %656 = vmatpush1.xpose.msra.mxu0 0.0
    %657 = vmatprep.subr.mxu0 0.0
    %658 = vmatpush1.xpose.msra.mxu0 0.0
    %659 = vmatprep.subr.mxu0 0.0
    %660 = vmatpush1.xpose.msra.mxu0 0.0
    %661 = vmatprep.subr.mxu0 0.0
    %662 = vmatpush1.xpose.msra.mxu0 0.0
    %663 = vmatprep.subr.mxu0 0.0
    %664 = vmatpush1.xpose.msra.mxu0 0.0
    %665 = vmatprep.subr.mxu0 0.0
    %666 = vmatpush1.xpose.msra.mxu0 0.0
    %667 = vmatprep.subr.mxu0 0.0
    %668 = vmatpush1.xpose.msra.mxu0 0.0
    %669 = vmatprep.subr.mxu0 0.0
    %670 = vmatpush1.xpose.msra.mxu0 0.0
    %671 = vmatprep.subr.mxu0 0.0
    %672 = vmatpush1.xpose.msra.mxu0 0.0
    %673 = vmatprep.subr.mxu0 0.0
    %674 = vmatpush1.xpose.msra.mxu0 0.0
    %675 = vmatprep.subr.mxu0 0.0
    %676 = vmatpush1.xpose.msra.mxu0 0.0
    %677 = vmatprep.subr.mxu0 0.0
    %678 = vmatpush1.xpose.msra.mxu0 0.0
    %679 = vmatprep.subr.mxu0 0.0
    %680 = vmatpush1.xpose.msra.mxu0 0.0
    %681 = vmatprep.subr.mxu0 0.0
    %682 = vmatpush1.xpose.msra.mxu0 0.0
    %683 = vmatprep.subr.mxu0 0.0
    %684 = vmatpush1.xpose.msra.mxu0 0.0
    %685 = vmatprep.subr.mxu0 0.0
    %686 = vmatpush1.xpose.msra.mxu0 0.0
    %687 = vmatprep.subr.mxu0 0.0
    %688 = vmatpush1.xpose.msra.mxu0 0.0
    %689 = vmatprep.subr.mxu0 0.0
    %690 = vmatpush1.xpose.msra.mxu0 0.0
    %691 = vmatprep.subr.mxu0 0.0
    %692 = vmatpush1.xpose.msra.mxu0 0.0
    %693 = vmatprep.mubr.f32.mxu0 0.0
    %694 = vmatmul.mubr.f32.gmra.mrb[0].mxu0 %v625
    %v695 = vpop.f32.mrb[0].mxu0
    %v696 = vadd.f32 0.0, %v695
    %v697 = vpop.f32.mrb[0].mxu0
    %698 = vdwg.mxu0
    %699 = vrot.lane.b32.xlu0 %v160, 96
    %v700 = vpop.permute.xlu0 %699
    %v701 = vsel %vm168, %v160, 0
    %v703 = vsel %vm168, %v700, 0
    %705 = vmatprep.subr.mxu0 0.0
    %706 = vmatpush1.xpose.msra.mxu0 %v703
    %707 = vmatprep.subr.mxu0 0.0
    %708 = vmatpush1.xpose.msra.mxu0 0.0
    %709 = vmatprep.subr.mxu0 0.0
    %710 = vmatpush1.xpose.msra.mxu0 0.0
    %711 = vmatprep.subr.mxu0 0.0
    %712 = vmatpush1.xpose.msra.mxu0 0.0
    %713 = vmatprep.subr.mxu0 0.0
    %714 = vmatpush1.xpose.msra.mxu0 0.0
    %715 = vmatprep.subr.mxu0 0.0
    %716 = vmatpush1.xpose.msra.mxu0 0.0
    %717 = vmatprep.subr.mxu0 0.0
    %718 = vmatpush1.xpose.msra.mxu0 0.0
    %719 = vmatprep.subr.mxu0 0.0
    %720 = vmatpush1.xpose.msra.mxu0 0.0
    %721 = vmatprep.subr.mxu0 0.0
    %722 = vmatpush1.xpose.msra.mxu0 0.0
    %723 = vmatprep.subr.mxu0 0.0
    %724 = vmatpush1.xpose.msra.mxu0 0.0
    %725 = vmatprep.subr.mxu0 0.0
    %726 = vmatpush1.xpose.msra.mxu0 0.0
    %727 = vmatprep.subr.mxu0 0.0
    %728 = vmatpush1.xpose.msra.mxu0 0.0
    %729 = vmatprep.subr.mxu0 0.0
    %730 = vmatpush1.xpose.msra.mxu0 0.0
    %731 = vmatprep.subr.mxu0 0.0
    %732 = vmatpush1.xpose.msra.mxu0 0.0
    %733 = vmatprep.subr.mxu0 0.0
    %734 = vmatpush1.xpose.msra.mxu0 0.0
    %735 = vmatprep.subr.mxu0 0.0
    %736 = vmatpush1.xpose.msra.mxu0 0.0
    %737 = vmatprep.subr.mxu0 0.0
    %738 = vmatpush1.xpose.msra.mxu0 0.0
    %739 = vmatprep.subr.mxu0 0.0
    %740 = vmatpush1.xpose.msra.mxu0 0.0
    %741 = vmatprep.subr.mxu0 0.0
    %742 = vmatpush1.xpose.msra.mxu0 0.0
    %743 = vmatprep.subr.mxu0 0.0
    %744 = vmatpush1.xpose.msra.mxu0 0.0
    %745 = vmatprep.subr.mxu0 0.0
    %746 = vmatpush1.xpose.msra.mxu0 0.0
    %747 = vmatprep.subr.mxu0 0.0
    %748 = vmatpush1.xpose.msra.mxu0 0.0
    %749 = vmatprep.subr.mxu0 0.0
    %750 = vmatpush1.xpose.msra.mxu0 0.0
    %751 = vmatprep.subr.mxu0 0.0
    %752 = vmatpush1.xpose.msra.mxu0 0.0
    %753 = vmatprep.subr.mxu0 0.0
    %754 = vmatpush1.xpose.msra.mxu0 0.0
    %755 = vmatprep.subr.mxu0 0.0
    %756 = vmatpush1.xpose.msra.mxu0 0.0
    %757 = vmatprep.subr.mxu0 0.0
    %758 = vmatpush1.xpose.msra.mxu0 0.0
    %759 = vmatprep.subr.mxu0 0.0
    %760 = vmatpush1.xpose.msra.mxu0 0.0
    %761 = vmatprep.subr.mxu0 0.0
    %762 = vmatpush1.xpose.msra.mxu0 0.0
    %763 = vmatprep.subr.mxu0 0.0
    %764 = vmatpush1.xpose.msra.mxu0 0.0
    %765 = vmatprep.subr.mxu0 0.0
    %766 = vmatpush1.xpose.msra.mxu0 0.0
    %767 = vmatprep.subr.mxu0 0.0
    %768 = vmatpush1.xpose.msra.mxu0 0.0
    %769 = vmatprep.mubr.f32.mxu0 0.0
    %770 = vmatmul.mubr.f32.gmra.mrb[0].mxu0 %v701
    %v771 = vpop.f32.mrb[0].mxu0
    %v772 = vadd.f32 0.0, %v771
    %v773 = vpop.f32.mrb[0].mxu0
    %774 = vdwg.mxu0
    %v775 = vmul.f32 %v240, 0.35355338
    %v776 = vmul.f32 %v316, 0.35355338
    %v777 = vmul.f32 %v392, 0.35355338
    %v778 = vmul.f32 %v468, 0.35355338
    %v779 = vmul.f32 %v544, 0.35355338
    %v780 = vmul.f32 %v620, 0.35355338
    %v781 = vmul.f32 %v696, 0.35355338
    %v782 = vmul.f32 %v772, 0.35355338
    %v783 = vsel %vm165, 1, 0
    %vm784 = vcmp.eq.s32.totalorder %v783, 1
    %v785 = vsel %vm784, %v775, -inf
    %v786 = vsel %vm784, %v776, -inf
    %v787 = vsel %vm784, %v777, -inf
    %v788 = vsel %vm784, %v778, -inf
    %v789 = vsel %vm784, %v779, -inf
    %v790 = vsel %vm784, %v780, -inf
    %v791 = vsel %vm784, %v781, -inf
    %v792 = vsel %vm784, %v782, -inf
    %v793 = vsel %vm168, %v785, -inf
    %794 = vmax.xlane.f32.xlu0 %v793
    %v795 = vpop.xlane.xlu0 %794
    %v796 = vsel %vm168, %v786, -inf
    %797 = vmax.xlane.f32.xlu0 %v796
    %v798 = vpop.xlane.xlu0 %797
    %v799 = vsel %vm168, %v787, -inf
    %800 = vmax.xlane.f32.xlu0 %v799
    %v801 = vpop.xlane.xlu0 %800
    %v802 = vsel %vm168, %v788, -inf
    %803 = vmax.xlane.f32.xlu0 %v802
    %v804 = vpop.xlane.xlu0 %803
    %v805 = vsel %vm168, %v789, -inf
    %806 = vmax.xlane.f32.xlu0 %v805
    %v807 = vpop.xlane.xlu0 %806
    %v808 = vsel %vm168, %v790, -inf
    %809 = vmax.xlane.f32.xlu0 %v808
    %v810 = vpop.xlane.xlu0 %809
    %v811 = vsel %vm168, %v791, -inf
    %812 = vmax.xlane.f32.xlu0 %v811
    %v813 = vpop.xlane.xlu0 %812
    %v814 = vsel %vm168, %v792, -inf
    %815 = vmax.xlane.f32.xlu0 %v814
    %v816 = vpop.xlane.xlu0 %815
    %v817 = vsub.f32 %v785, %v795
    %v818 = vsub.f32 %v786, %v798
    %v819 = vsub.f32 %v787, %v801
    %v820 = vsub.f32 %v788, %v804
    %v821 = vsub.f32 %v789, %v807
    %v822 = vsub.f32 %v790, %v810
    %v823 = vsub.f32 %v791, %v813
    %v824 = vsub.f32 %v792, %v816
    %v825 = vmul.f32 %v817, 1.442695
    %v826 = vpow.pop %v825
    %v827 = vmul.f32 %v818, 1.442695
    %v828 = vpow.pop %v827
    %v829 = vmul.f32 %v819, 1.442695
    %v830 = vpow.pop %v829
    %v831 = vmul.f32 %v820, 1.442695
    %v832 = vpow.pop %v831
    %v833 = vmul.f32 %v821, 1.442695
    %v834 = vpow.pop %v833
    %v835 = vmul.f32 %v822, 1.442695
    %v836 = vpow.pop %v835
    %v837 = vmul.f32 %v823, 1.442695
    %v838 = vpow.pop %v837
    %v839 = vmul.f32 %v824, 1.442695
    %v840 = vpow.pop %v839
    %v841 = vsel %vm168, %v826, 0.0
    %842 = vadd.xlane.f32.xlu0 %v841
    %v843 = vpop.xlane.xlu0 %842
    %v844 = vsel %vm168, %v828, 0.0
    %845 = vadd.xlane.f32.xlu0 %v844
    %v846 = vpop.xlane.xlu0 %845
    %v847 = vsel %vm168, %v830, 0.0
    %848 = vadd.xlane.f32.xlu0 %v847
    %v849 = vpop.xlane.xlu0 %848
    %v850 = vsel %vm168, %v832, 0.0
    %851 = vadd.xlane.f32.xlu0 %v850
    %v852 = vpop.xlane.xlu0 %851
    %v853 = vsel %vm168, %v834, 0.0
    %854 = vadd.xlane.f32.xlu0 %v853
    %v855 = vpop.xlane.xlu0 %854
    %v856 = vsel %vm168, %v836, 0.0
    %857 = vadd.xlane.f32.xlu0 %v856
    %v858 = vpop.xlane.xlu0 %857
    %v859 = vsel %vm168, %v838, 0.0
    %860 = vadd.xlane.f32.xlu0 %v859
    %v861 = vpop.xlane.xlu0 %860
    %v862 = vsel %vm168, %v840, 0.0
    %863 = vadd.xlane.f32.xlu0 %v862
    %v864 = vpop.xlane.xlu0 %863
    %v865 = vrcp.pop %v843
    %v866 = vmul.f32 %v826, %v865
    %v867 = vrcp.pop %v846
    %v868 = vmul.f32 %v828, %v867
    %v869 = vrcp.pop %v849
    %v870 = vmul.f32 %v830, %v869
    %v871 = vrcp.pop %v852
    %v872 = vmul.f32 %v832, %v871
    %v873 = vrcp.pop %v855
    %v874 = vmul.f32 %v834, %v873
    %v875 = vrcp.pop %v858
    %v876 = vmul.f32 %v836, %v875
    %v877 = vrcp.pop %v861
    %v878 = vmul.f32 %v838, %v877
    %v879 = vrcp.pop %v864
    %v880 = vmul.f32 %v840, %v879
    %881 = vrot.lane.b32.xlu0 %v139, 64
    %v882 = vpop.permute.xlu0 %881
    %v885 = vsel %vm168, %v866, 0
    %887 = vmatprep.subr.mxu0 0.0
    %888 = vmatpush1.msra.mxu0 %v882
    %889 = vmatprep.subr.mxu0 0.0
    %890 = vmatpush1.msra.mxu0 0.0
    %891 = vmatprep.subr.mxu0 0.0
    %892 = vmatpush1.msra.mxu0 0.0
    %893 = vmatprep.subr.mxu0 0.0
    %894 = vmatpush1.msra.mxu0 0.0
    %895 = vmatprep.subr.mxu0 0.0
    %896 = vmatpush1.msra.mxu0 0.0
    %897 = vmatprep.subr.mxu0 0.0
    %898 = vmatpush1.msra.mxu0 0.0
    %899 = vmatprep.subr.mxu0 0.0
    %900 = vmatpush1.msra.mxu0 0.0
    %901 = vmatprep.subr.mxu0 0.0
    %902 = vmatpush1.msra.mxu0 0.0
    %903 = vmatprep.subr.mxu0 0.0
    %904 = vmatpush1.msra.mxu0 0.0
    %905 = vmatprep.subr.mxu0 0.0
    %906 = vmatpush1.msra.mxu0 0.0
    %907 = vmatprep.subr.mxu0 0.0
    %908 = vmatpush1.msra.mxu0 0.0
    %909 = vmatprep.subr.mxu0 0.0
    %910 = vmatpush1.msra.mxu0 0.0
    %911 = vmatprep.subr.mxu0 0.0
    %912 = vmatpush1.msra.mxu0 0.0
    %913 = vmatprep.subr.mxu0 0.0
    %914 = vmatpush1.msra.mxu0 0.0
    %915 = vmatprep.subr.mxu0 0.0
    %916 = vmatpush1.msra.mxu0 0.0
    %917 = vmatprep.subr.mxu0 0.0
    %918 = vmatpush1.msra.mxu0 0.0
    %919 = vmatprep.subr.mxu0 0.0
    %920 = vmatpush1.msra.mxu0 0.0
    %921 = vmatprep.subr.mxu0 0.0
    %922 = vmatpush1.msra.mxu0 0.0
    %923 = vmatprep.subr.mxu0 0.0
    %924 = vmatpush1.msra.mxu0 0.0
    %925 = vmatprep.subr.mxu0 0.0
    %926 = vmatpush1.msra.mxu0 0.0
    %927 = vmatprep.subr.mxu0 0.0
    %928 = vmatpush1.msra.mxu0 0.0
    %929 = vmatprep.subr.mxu0 0.0
    %930 = vmatpush1.msra.mxu0 0.0
    %931 = vmatprep.subr.mxu0 0.0
    %932 = vmatpush1.msra.mxu0 0.0
    %933 = vmatprep.subr.mxu0 0.0
    %934 = vmatpush1.msra.mxu0 0.0
    %935 = vmatprep.subr.mxu0 0.0
    %936 = vmatpush1.msra.mxu0 0.0
    %937 = vmatprep.subr.mxu0 0.0
    %938 = vmatpush1.msra.mxu0 0.0
    %939 = vmatprep.subr.mxu0 0.0
    %940 = vmatpush1.msra.mxu0 0.0
    %941 = vmatprep.subr.mxu0 0.0
    %942 = vmatpush1.msra.mxu0 0.0
    %943 = vmatprep.subr.mxu0 0.0
    %944 = vmatpush1.msra.mxu0 0.0
    %945 = vmatprep.subr.mxu0 0.0
    %946 = vmatpush1.msra.mxu0 0.0
    %947 = vmatprep.subr.mxu0 0.0
    %948 = vmatpush1.msra.mxu0 0.0
    %949 = vmatprep.subr.mxu0 0.0
    %950 = vmatpush1.msra.mxu0 0.0
    %951 = vmatprep.mubr.f32.mxu0 0.0
    %952 = vmatmul.mubr.f32.gmra.mrb[0].mxu0 %v885
    %v953 = vpop.f32.mrb[0].mxu0
    %v954 = vadd.f32 0.0, %v953
    %v955 = vpop.f32.mrb[0].mxu0
    %956 = vdwg.mxu0
    %957 = vrot.lane.b32.xlu0 %v144, 64
    %v958 = vpop.permute.xlu0 %957
    %v961 = vsel %vm168, %v868, 0
    %963 = vmatprep.subr.mxu0 0.0
    %964 = vmatpush1.msra.mxu0 %v958
    %965 = vmatprep.subr.mxu0 0.0
    %966 = vmatpush1.msra.mxu0 0.0
    %967 = vmatprep.subr.mxu0 0.0
    %968 = vmatpush1.msra.mxu0 0.0
    %969 = vmatprep.subr.mxu0 0.0
    %970 = vmatpush1.msra.mxu0 0.0
    %971 = vmatprep.subr.mxu0 0.0
    %972 = vmatpush1.msra.mxu0 0.0
    %973 = vmatprep.subr.mxu0 0.0
    %974 = vmatpush1.msra.mxu0 0.0
    %975 = vmatprep.subr.mxu0 0.0
    %976 = vmatpush1.msra.mxu0 0.0
    %977 = vmatprep.subr.mxu0 0.0
    %978 = vmatpush1.msra.mxu0 0.0
    %979 = vmatprep.subr.mxu0 0.0
    %980 = vmatpush1.msra.mxu0 0.0
    %981 = vmatprep.subr.mxu0 0.0
    %982 = vmatpush1.msra.mxu0 0.0
    %983 = vmatprep.subr.mxu0 0.0
    %984 = vmatpush1.msra.mxu0 0.0
    %985 = vmatprep.subr.mxu0 0.0
    %986 = vmatpush1.msra.mxu0 0.0
    %987 = vmatprep.subr.mxu0 0.0
    %988 = vmatpush1.msra.mxu0 0.0
    %989 = vmatprep.subr.mxu0 0.0
    %990 = vmatpush1.msra.mxu0 0.0
    %991 = vmatprep.subr.mxu0 0.0
    %992 = vmatpush1.msra.mxu0 0.0
    %993 = vmatprep.subr.mxu0 0.0
    %994 = vmatpush1.msra.mxu0 0.0
    %995 = vmatprep.subr.mxu0 0.0
    %996 = vmatpush1.msra.mxu0 0.0
    %997 = vmatprep.subr.mxu0 0.0
    %998 = vmatpush1.msra.mxu0 0.0
    %999 = vmatprep.subr.mxu0 0.0
    %1000 = vmatpush1.msra.mxu0 0.0
    %1001 = vmatprep.subr.mxu0 0.0
    %1002 = vmatpush1.msra.mxu0 0.0
    %1003 = vmatprep.subr.mxu0 0.0
    %1004 = vmatpush1.msra.mxu0 0.0
    %1005 = vmatprep.subr.mxu0 0.0
    %1006 = vmatpush1.msra.mxu0 0.0
    %1007 = vmatprep.subr.mxu0 0.0
    %1008 = vmatpush1.msra.mxu0 0.0
    %1009 = vmatprep.subr.mxu0 0.0
    %1010 = vmatpush1.msra.mxu0 0.0
    %1011 = vmatprep.subr.mxu0 0.0
    %1012 = vmatpush1.msra.mxu0 0.0
    %1013 = vmatprep.subr.mxu0 0.0
    %1014 = vmatpush1.msra.mxu0 0.0
    %1015 = vmatprep.subr.mxu0 0.0
    %1016 = vmatpush1.msra.mxu0 0.0
    %1017 = vmatprep.subr.mxu0 0.0
    %1018 = vmatpush1.msra.mxu0 0.0
    %1019 = vmatprep.subr.mxu0 0.0
    %1020 = vmatpush1.msra.mxu0 0.0
    %1021 = vmatprep.subr.mxu0 0.0
    %1022 = vmatpush1.msra.mxu0 0.0
    %1023 = vmatprep.subr.mxu0 0.0
    %1024 = vmatpush1.msra.mxu0 0.0
    %1025 = vmatprep.subr.mxu0 0.0
    %1026 = vmatpush1.msra.mxu0 0.0
    %1027 = vmatprep.mubr.f32.mxu0 0.0
    %1028 = vmatmul.mubr.f32.gmra.mrb[0].mxu0 %v961
    %v1029 = vpop.f32.mrb[0].mxu0
    %v1030 = vadd.f32 0.0, %v1029
    %v1031 = vpop.f32.mrb[0].mxu0
    %1032 = vdwg.mxu0
    %1033 = vrot.lane.b32.xlu0 %v150, 64
    %v1034 = vpop.permute.xlu0 %1033
    %v1037 = vsel %vm168, %v870, 0
    %1039 = vmatprep.subr.mxu0 0.0
    %1040 = vmatpush1.msra.mxu0 %v1034
    %1041 = vmatprep.subr.mxu0 0.0
    %1042 = vmatpush1.msra.mxu0 0.0
    %1043 = vmatprep.subr.mxu0 0.0
    %1044 = vmatpush1.msra.mxu0 0.0
    %1045 = vmatprep.subr.mxu0 0.0
    %1046 = vmatpush1.msra.mxu0 0.0
    %1047 = vmatprep.subr.mxu0 0.0
    %1048 = vmatpush1.msra.mxu0 0.0
    %1049 = vmatprep.subr.mxu0 0.0
    %1050 = vmatpush1.msra.mxu0 0.0
    %1051 = vmatprep.subr.mxu0 0.0
    %1052 = vmatpush1.msra.mxu0 0.0
    %1053 = vmatprep.subr.mxu0 0.0
    %1054 = vmatpush1.msra.mxu0 0.0
    %1055 = vmatprep.subr.mxu0 0.0
    %1056 = vmatpush1.msra.mxu0 0.0
    %1057 = vmatprep.subr.mxu0 0.0
    %1058 = vmatpush1.msra.mxu0 0.0
    %1059 = vmatprep.subr.mxu0 0.0
    %1060 = vmatpush1.msra.mxu0 0.0
    %1061 = vmatprep.subr.mxu0 0.0
    %1062 = vmatpush1.msra.mxu0 0.0
    %1063 = vmatprep.subr.mxu0 0.0
    %1064 = vmatpush1.msra.mxu0 0.0
    %1065 = vmatprep.subr.mxu0 0.0
    %1066 = vmatpush1.msra.mxu0 0.0
    %1067 = vmatprep.subr.mxu0 0.0
    %1068 = vmatpush1.msra.mxu0 0.0
    %1069 = vmatprep.subr.mxu0 0.0
    %1070 = vmatpush1.msra.mxu0 0.0
    %1071 = vmatprep.subr.mxu0 0.0
    %1072 = vmatpush1.msra.mxu0 0.0
    %1073 = vmatprep.subr.mxu0 0.0
    %1074 = vmatpush1.msra.mxu0 0.0
    %1075 = vmatprep.subr.mxu0 0.0
    %1076 = vmatpush1.msra.mxu0 0.0
    %1077 = vmatprep.subr.mxu0 0.0
    %1078 = vmatpush1.msra.mxu0 0.0
    %1079 = vmatprep.subr.mxu0 0.0
    %1080 = vmatpush1.msra.mxu0 0.0
    %1081 = vmatprep.subr.mxu0 0.0
    %1082 = vmatpush1.msra.mxu0 0.0
    %1083 = vmatprep.subr.mxu0 0.0
    %1084 = vmatpush1.msra.mxu0 0.0
    %1085 = vmatprep.subr.mxu0 0.0
    %1086 = vmatpush1.msra.mxu0 0.0
    %1087 = vmatprep.subr.mxu0 0.0
    %1088 = vmatpush1.msra.mxu0 0.0
    %1089 = vmatprep.subr.mxu0 0.0
    %1090 = vmatpush1.msra.mxu0 0.0
    %1091 = vmatprep.subr.mxu0 0.0
    %1092 = vmatpush1.msra.mxu0 0.0
    %1093 = vmatprep.subr.mxu0 0.0
    %1094 = vmatpush1.msra.mxu0 0.0
    %1095 = vmatprep.subr.mxu0 0.0
    %1096 = vmatpush1.msra.mxu0 0.0
    %1097 = vmatprep.subr.mxu0 0.0
    %1098 = vmatpush1.msra.mxu0 0.0
    %1099 = vmatprep.subr.mxu0 0.0
    %1100 = vmatpush1.msra.mxu0 0.0
    %1101 = vmatprep.subr.mxu0 0.0
    %1102 = vmatpush1.msra.mxu0 0.0
    %1103 = vmatprep.mubr.f32.mxu0 0.0
    %1104 = vmatmul.mubr.f32.gmra.mrb[0].mxu0 %v1037
    %v1105 = vpop.f32.mrb[0].mxu0
    %v1106 = vadd.f32 0.0, %v1105
    %v1107 = vpop.f32.mrb[0].mxu0
    %1108 = vdwg.mxu0
    %1109 = vrot.lane.b32.xlu0 %v152, 64
    %v1110 = vpop.permute.xlu0 %1109
    %v1113 = vsel %vm168, %v872, 0
    %1115 = vmatprep.subr.mxu0 0.0
    %1116 = vmatpush1.msra.mxu0 %v1110
    %1117 = vmatprep.subr.mxu0 0.0
    %1118 = vmatpush1.msra.mxu0 0.0
    %1119 = vmatprep.subr.mxu0 0.0
    %1120 = vmatpush1.msra.mxu0 0.0
    %1121 = vmatprep.subr.mxu0 0.0
    %1122 = vmatpush1.msra.mxu0 0.0
    %1123 = vmatprep.subr.mxu0 0.0
    %1124 = vmatpush1.msra.mxu0 0.0
    %1125 = vmatprep.subr.mxu0 0.0
    %1126 = vmatpush1.msra.mxu0 0.0
    %1127 = vmatprep.subr.mxu0 0.0
    %1128 = vmatpush1.msra.mxu0 0.0
    %1129 = vmatprep.subr.mxu0 0.0
    %1130 = vmatpush1.msra.mxu0 0.0
    %1131 = vmatprep.subr.mxu0 0.0
    %1132 = vmatpush1.msra.mxu0 0.0
    %1133 = vmatprep.subr.mxu0 0.0
    %1134 = vmatpush1.msra.mxu0 0.0
    %1135 = vmatprep.subr.mxu0 0.0
    %1136 = vmatpush1.msra.mxu0 0.0
    %1137 = vmatprep.subr.mxu0 0.0
    %1138 = vmatpush1.msra.mxu0 0.0
    %1139 = vmatprep.subr.mxu0 0.0
    %1140 = vmatpush1.msra.mxu0 0.0
    %1141 = vmatprep.subr.mxu0 0.0
    %1142 = vmatpush1.msra.mxu0 0.0
    %1143 = vmatprep.subr.mxu0 0.0
    %1144 = vmatpush1.msra.mxu0 0.0
    %1145 = vmatprep.subr.mxu0 0.0
    %1146 = vmatpush1.msra.mxu0 0.0
    %1147 = vmatprep.subr.mxu0 0.0
    %1148 = vmatpush1.msra.mxu0 0.0
    %1149 = vmatprep.subr.mxu0 0.0
    %1150 = vmatpush1.msra.mxu0 0.0
    %1151 = vmatprep.subr.mxu0 0.0
    %1152 = vmatpush1.msra.mxu0 0.0
    %1153 = vmatprep.subr.mxu0 0.0
    %1154 = vmatpush1.msra.mxu0 0.0
    %1155 = vmatprep.subr.mxu0 0.0
    %1156 = vmatpush1.msra.mxu0 0.0
    %1157 = vmatprep.subr.mxu0 0.0
    %1158 = vmatpush1.msra.mxu0 0.0
    %1159 = vmatprep.subr.mxu0 0.0
    %1160 = vmatpush1.msra.mxu0 0.0
    %1161 = vmatprep.subr.mxu0 0.0
    %1162 = vmatpush1.msra.mxu0 0.0
    %1163 = vmatprep.subr.mxu0 0.0
    %1164 = vmatpush1.msra.mxu0 0.0
    %1165 = vmatprep.subr.mxu0 0.0
    %1166 = vmatpush1.msra.mxu0 0.0
    %1167 = vmatprep.subr.mxu0 0.0
    %1168 = vmatpush1.msra.mxu0 0.0
    %1169 = vmatprep.subr.mxu0 0.0
    %1170 = vmatpush1.msra.mxu0 0.0
    %1171 = vmatprep.subr.mxu0 0.0
    %1172 = vmatpush1.msra.mxu0 0.0
    %1173 = vmatprep.subr.mxu0 0.0
    %1174 = vmatpush1.msra.mxu0 0.0
    %1175 = vmatprep.subr.mxu0 0.0
    %1176 = vmatpush1.msra.mxu0 0.0
    %1177 = vmatprep.subr.mxu0 0.0
    %1178 = vmatpush1.msra.mxu0 0.0
    %1179 = vmatprep.mubr.f32.mxu0 0.0
    %1180 = vmatmul.mubr.f32.gmra.mrb[0].mxu0 %v1113
    %v1181 = vpop.f32.mrb[0].mxu0
    %v1182 = vadd.f32 0.0, %v1181
    %v1183 = vpop.f32.mrb[0].mxu0
    %1184 = vdwg.mxu0
    %1185 = vrot.lane.b32.xlu0 %v154, 64
    %v1186 = vpop.permute.xlu0 %1185
    %v1189 = vsel %vm168, %v874, 0
    %1191 = vmatprep.subr.mxu0 0.0
    %1192 = vmatpush1.msra.mxu0 %v1186
    %1193 = vmatprep.subr.mxu0 0.0
    %1194 = vmatpush1.msra.mxu0 0.0
    %1195 = vmatprep.subr.mxu0 0.0
    %1196 = vmatpush1.msra.mxu0 0.0
    %1197 = vmatprep.subr.mxu0 0.0
    %1198 = vmatpush1.msra.mxu0 0.0
    %1199 = vmatprep.subr.mxu0 0.0
    %1200 = vmatpush1.msra.mxu0 0.0
    %1201 = vmatprep.subr.mxu0 0.0
    %1202 = vmatpush1.msra.mxu0 0.0
    %1203 = vmatprep.subr.mxu0 0.0
    %1204 = vmatpush1.msra.mxu0 0.0
    %1205 = vmatprep.subr.mxu0 0.0
    %1206 = vmatpush1.msra.mxu0 0.0
    %1207 = vmatprep.subr.mxu0 0.0
    %1208 = vmatpush1.msra.mxu0 0.0
    %1209 = vmatprep.subr.mxu0 0.0
    %1210 = vmatpush1.msra.mxu0 0.0
    %1211 = vmatprep.subr.mxu0 0.0
    %1212 = vmatpush1.msra.mxu0 0.0
    %1213 = vmatprep.subr.mxu0 0.0
    %1214 = vmatpush1.msra.mxu0 0.0
    %1215 = vmatprep.subr.mxu0 0.0
    %1216 = vmatpush1.msra.mxu0 0.0
    %1217 = vmatprep.subr.mxu0 0.0
    %1218 = vmatpush1.msra.mxu0 0.0
    %1219 = vmatprep.subr.mxu0 0.0
    %1220 = vmatpush1.msra.mxu0 0.0
    %1221 = vmatprep.subr.mxu0 0.0
    %1222 = vmatpush1.msra.mxu0 0.0
    %1223 = vmatprep.subr.mxu0 0.0
    %1224 = vmatpush1.msra.mxu0 0.0
    %1225 = vmatprep.subr.mxu0 0.0
    %1226 = vmatpush1.msra.mxu0 0.0
    %1227 = vmatprep.subr.mxu0 0.0
    %1228 = vmatpush1.msra.mxu0 0.0
    %1229 = vmatprep.subr.mxu0 0.0
    %1230 = vmatpush1.msra.mxu0 0.0
    %1231 = vmatprep.subr.mxu0 0.0
    %1232 = vmatpush1.msra.mxu0 0.0
    %1233 = vmatprep.subr.mxu0 0.0
    %1234 = vmatpush1.msra.mxu0 0.0
    %1235 = vmatprep.subr.mxu0 0.0
    %1236 = vmatpush1.msra.mxu0 0.0
    %1237 = vmatprep.subr.mxu0 0.0
    %1238 = vmatpush1.msra.mxu0 0.0
    %1239 = vmatprep.subr.mxu0 0.0
    %1240 = vmatpush1.msra.mxu0 0.0
    %1241 = vmatprep.subr.mxu0 0.0
    %1242 = vmatpush1.msra.mxu0 0.0
    %1243 = vmatprep.subr.mxu0 0.0
    %1244 = vmatpush1.msra.mxu0 0.0
    %1245 = vmatprep.subr.mxu0 0.0
    %1246 = vmatpush1.msra.mxu0 0.0
    %1247 = vmatprep.subr.mxu0 0.0
    %1248 = vmatpush1.msra.mxu0 0.0
    %1249 = vmatprep.subr.mxu0 0.0
    %1250 = vmatpush1.msra.mxu0 0.0
    %1251 = vmatprep.subr.mxu0 0.0
    %1252 = vmatpush1.msra.mxu0 0.0
    %1253 = vmatprep.subr.mxu0 0.0
    %1254 = vmatpush1.msra.mxu0 0.0
    %1255 = vmatprep.mubr.f32.mxu0 0.0
    %1256 = vmatmul.mubr.f32.gmra.mrb[0].mxu0 %v1189
    %v1257 = vpop.f32.mrb[0].mxu0
    %v1258 = vadd.f32 0.0, %v1257
    %v1259 = vpop.f32.mrb[0].mxu0
    %1260 = vdwg.mxu0
    %1261 = vrot.lane.b32.xlu0 %v156, 64
    %v1262 = vpop.permute.xlu0 %1261
    %v1265 = vsel %vm168, %v876, 0
    %1267 = vmatprep.subr.mxu0 0.0
    %1268 = vmatpush1.msra.mxu0 %v1262
    %1269 = vmatprep.subr.mxu0 0.0
    %1270 = vmatpush1.msra.mxu0 0.0
    %1271 = vmatprep.subr.mxu0 0.0
    %1272 = vmatpush1.msra.mxu0 0.0
    %1273 = vmatprep.subr.mxu0 0.0
    %1274 = vmatpush1.msra.mxu0 0.0
    %1275 = vmatprep.subr.mxu0 0.0
    %1276 = vmatpush1.msra.mxu0 0.0
    %1277 = vmatprep.subr.mxu0 0.0
    %1278 = vmatpush1.msra.mxu0 0.0
    %1279 = vmatprep.subr.mxu0 0.0
    %1280 = vmatpush1.msra.mxu0 0.0
    %1281 = vmatprep.subr.mxu0 0.0
    %1282 = vmatpush1.msra.mxu0 0.0
    %1283 = vmatprep.subr.mxu0 0.0
    %1284 = vmatpush1.msra.mxu0 0.0
    %1285 = vmatprep.subr.mxu0 0.0
    %1286 = vmatpush1.msra.mxu0 0.0
    %1287 = vmatprep.subr.mxu0 0.0
    %1288 = vmatpush1.msra.mxu0 0.0
    %1289 = vmatprep.subr.mxu0 0.0
    %1290 = vmatpush1.msra.mxu0 0.0
    %1291 = vmatprep.subr.mxu0 0.0
    %1292 = vmatpush1.msra.mxu0 0.0
    %1293 = vmatprep.subr.mxu0 0.0
    %1294 = vmatpush1.msra.mxu0 0.0
    %1295 = vmatprep.subr.mxu0 0.0
    %1296 = vmatpush1.msra.mxu0 0.0
    %1297 = vmatprep.subr.mxu0 0.0
    %1298 = vmatpush1.msra.mxu0 0.0
    %1299 = vmatprep.subr.mxu0 0.0
    %1300 = vmatpush1.msra.mxu0 0.0
    %1301 = vmatprep.subr.mxu0 0.0
    %1302 = vmatpush1.msra.mxu0 0.0
    %1303 = vmatprep.subr.mxu0 0.0
    %1304 = vmatpush1.msra.mxu0 0.0
    %1305 = vmatprep.subr.mxu0 0.0
    %1306 = vmatpush1.msra.mxu0 0.0
    %1307 = vmatprep.subr.mxu0 0.0
    %1308 = vmatpush1.msra.mxu0 0.0
    %1309 = vmatprep.subr.mxu0 0.0
    %1310 = vmatpush1.msra.mxu0 0.0
    %1311 = vmatprep.subr.mxu0 0.0
    %1312 = vmatpush1.msra.mxu0 0.0
    %1313 = vmatprep.subr.mxu0 0.0
    %1314 = vmatpush1.msra.mxu0 0.0
    %1315 = vmatprep.subr.mxu0 0.0
    %1316 = vmatpush1.msra.mxu0 0.0
    %1317 = vmatprep.subr.mxu0 0.0
    %1318 = vmatpush1.msra.mxu0 0.0
    %1319 = vmatprep.subr.mxu0 0.0
    %1320 = vmatpush1.msra.mxu0 0.0
    %1321 = vmatprep.subr.mxu0 0.0
    %1322 = vmatpush1.msra.mxu0 0.0
    %1323 = vmatprep.subr.mxu0 0.0
    %1324 = vmatpush1.msra.mxu0 0.0
    %1325 = vmatprep.subr.mxu0 0.0
    %1326 = vmatpush1.msra.mxu0 0.0
    %1327 = vmatprep.subr.mxu0 0.0
    %1328 = vmatpush1.msra.mxu0 0.0
    %1329 = vmatprep.subr.mxu0 0.0
    %1330 = vmatpush1.msra.mxu0 0.0
    %1331 = vmatprep.mubr.f32.mxu0 0.0
    %1332 = vmatmul.mubr.f32.gmra.mrb[0].mxu0 %v1265
    %v1333 = vpop.f32.mrb[0].mxu0
    %v1334 = vadd.f32 0.0, %v1333
    %v1335 = vpop.f32.mrb[0].mxu0
    %1336 = vdwg.mxu0
    %1337 = vrot.lane.b32.xlu0 %v158, 64
    %v1338 = vpop.permute.xlu0 %1337
    %v1341 = vsel %vm168, %v878, 0
    %1343 = vmatprep.subr.mxu0 0.0
    %1344 = vmatpush1.msra.mxu0 %v1338
    %1345 = vmatprep.subr.mxu0 0.0
    %1346 = vmatpush1.msra.mxu0 0.0
    %1347 = vmatprep.subr.mxu0 0.0
    %1348 = vmatpush1.msra.mxu0 0.0
    %1349 = vmatprep.subr.mxu0 0.0
    %1350 = vmatpush1.msra.mxu0 0.0
    %1351 = vmatprep.subr.mxu0 0.0
    %1352 = vmatpush1.msra.mxu0 0.0
    %1353 = vmatprep.subr.mxu0 0.0
    %1354 = vmatpush1.msra.mxu0 0.0
    %1355 = vmatprep.subr.mxu0 0.0
    %1356 = vmatpush1.msra.mxu0 0.0
    %1357 = vmatprep.subr.mxu0 0.0
    %1358 = vmatpush1.msra.mxu0 0.0
    %1359 = vmatprep.subr.mxu0 0.0
    %1360 = vmatpush1.msra.mxu0 0.0
    %1361 = vmatprep.subr.mxu0 0.0
    %1362 = vmatpush1.msra.mxu0 0.0
    %1363 = vmatprep.subr.mxu0 0.0
    %1364 = vmatpush1.msra.mxu0 0.0
    %1365 = vmatprep.subr.mxu0 0.0
    %1366 = vmatpush1.msra.mxu0 0.0
    %1367 = vmatprep.subr.mxu0 0.0
    %1368 = vmatpush1.msra.mxu0 0.0
    %1369 = vmatprep.subr.mxu0 0.0
    %1370 = vmatpush1.msra.mxu0 0.0
    %1371 = vmatprep.subr.mxu0 0.0
    %1372 = vmatpush1.msra.mxu0 0.0
    %1373 = vmatprep.subr.mxu0 0.0
    %1374 = vmatpush1.msra.mxu0 0.0
    %1375 = vmatprep.subr.mxu0 0.0
    %1376 = vmatpush1.msra.mxu0 0.0
    %1377 = vmatprep.subr.mxu0 0.0
    %1378 = vmatpush1.msra.mxu0 0.0
    %1379 = vmatprep.subr.mxu0 0.0
    %1380 = vmatpush1.msra.mxu0 0.0
    %1381 = vmatprep.subr.mxu0 0.0
    %1382 = vmatpush1.msra.mxu0 0.0
    %1383 = vmatprep.subr.mxu0 0.0
    %1384 = vmatpush1.msra.mxu0 0.0
    %1385 = vmatprep.subr.mxu0 0.0
    %1386 = vmatpush1.msra.mxu0 0.0
    %1387 = vmatprep.subr.mxu0 0.0
    %1388 = vmatpush1.msra.mxu0 0.0
    %1389 = vmatprep.subr.mxu0 0.0
    %1390 = vmatpush1.msra.mxu0 0.0
    %1391 = vmatprep.subr.mxu0 0.0
    %1392 = vmatpush1.msra.mxu0 0.0
    %1393 = vmatprep.subr.mxu0 0.0
    %1394 = vmatpush1.msra.mxu0 0.0
    %1395 = vmatprep.subr.mxu0 0.0
    %1396 = vmatpush1.msra.mxu0 0.0
    %1397 = vmatprep.subr.mxu0 0.0
    %1398 = vmatpush1.msra.mxu0 0.0
    %1399 = vmatprep.subr.mxu0 0.0
    %1400 = vmatpush1.msra.mxu0 0.0
    %1401 = vmatprep.subr.mxu0 0.0
    %1402 = vmatpush1.msra.mxu0 0.0
    %1403 = vmatprep.subr.mxu0 0.0
    %1404 = vmatpush1.msra.mxu0 0.0
    %1405 = vmatprep.subr.mxu0 0.0
    %1406 = vmatpush1.msra.mxu0 0.0
    %1407 = vmatprep.mubr.f32.mxu0 0.0
    %1408 = vmatmul.mubr.f32.gmra.mrb[0].mxu0 %v1341
    %v1409 = vpop.f32.mrb[0].mxu0
    %v1410 = vadd.f32 0.0, %v1409
    %v1411 = vpop.f32.mrb[0].mxu0
    %1412 = vdwg.mxu0
    %1413 = vrot.lane.b32.xlu0 %v160, 64
    %v1414 = vpop.permute.xlu0 %1413
    %v1417 = vsel %vm168, %v880, 0
    %1419 = vmatprep.subr.mxu0 0.0
    %1420 = vmatpush1.msra.mxu0 %v1414
    %1421 = vmatprep.subr.mxu0 0.0
    %1422 = vmatpush1.msra.mxu0 0.0
    %1423 = vmatprep.subr.mxu0 0.0
    %1424 = vmatpush1.msra.mxu0 0.0
    %1425 = vmatprep.subr.mxu0 0.0
    %1426 = vmatpush1.msra.mxu0 0.0
    %1427 = vmatprep.subr.mxu0 0.0
    %1428 = vmatpush1.msra.mxu0 0.0
    %1429 = vmatprep.subr.mxu0 0.0
    %1430 = vmatpush1.msra.mxu0 0.0
    %1431 = vmatprep.subr.mxu0 0.0
    %1432 = vmatpush1.msra.mxu0 0.0
    %1433 = vmatprep.subr.mxu0 0.0
    %1434 = vmatpush1.msra.mxu0 0.0
    %1435 = vmatprep.subr.mxu0 0.0
    %1436 = vmatpush1.msra.mxu0 0.0
    %1437 = vmatprep.subr.mxu0 0.0
    %1438 = vmatpush1.msra.mxu0 0.0
    %1439 = vmatprep.subr.mxu0 0.0
    %1440 = vmatpush1.msra.mxu0 0.0
    %1441 = vmatprep.subr.mxu0 0.0
    %1442 = vmatpush1.msra.mxu0 0.0
    %1443 = vmatprep.subr.mxu0 0.0
    %1444 = vmatpush1.msra.mxu0 0.0
    %1445 = vmatprep.subr.mxu0 0.0
    %1446 = vmatpush1.msra.mxu0 0.0
    %1447 = vmatprep.subr.mxu0 0.0
    %1448 = vmatpush1.msra.mxu0 0.0
    %1449 = vmatprep.subr.mxu0 0.0
    %1450 = vmatpush1.msra.mxu0 0.0
    %1451 = vmatprep.subr.mxu0 0.0
    %1452 = vmatpush1.msra.mxu0 0.0
    %1453 = vmatprep.subr.mxu0 0.0
    %1454 = vmatpush1.msra.mxu0 0.0
    %1455 = vmatprep.subr.mxu0 0.0
    %1456 = vmatpush1.msra.mxu0 0.0
    %1457 = vmatprep.subr.mxu0 0.0
    %1458 = vmatpush1.msra.mxu0 0.0
    %1459 = vmatprep.subr.mxu0 0.0
    %1460 = vmatpush1.msra.mxu0 0.0
    %1461 = vmatprep.subr.mxu0 0.0
    %1462 = vmatpush1.msra.mxu0 0.0
    %1463 = vmatprep.subr.mxu0 0.0
    %1464 = vmatpush1.msra.mxu0 0.0
    %1465 = vmatprep.subr.mxu0 0.0
    %1466 = vmatpush1.msra.mxu0 0.0
    %1467 = vmatprep.subr.mxu0 0.0
    %1468 = vmatpush1.msra.mxu0 0.0
    %1469 = vmatprep.subr.mxu0 0.0
    %1470 = vmatpush1.msra.mxu0 0.0
    %1471 = vmatprep.subr.mxu0 0.0
    %1472 = vmatpush1.msra.mxu0 0.0
    %1473 = vmatprep.subr.mxu0 0.0
    %1474 = vmatpush1.msra.mxu0 0.0
    %1475 = vmatprep.subr.mxu0 0.0
    %1476 = vmatpush1.msra.mxu0 0.0
    %1477 = vmatprep.subr.mxu0 0.0
    %1478 = vmatpush1.msra.mxu0 0.0
    %1479 = vmatprep.subr.mxu0 0.0
    %1480 = vmatpush1.msra.mxu0 0.0
    %1481 = vmatprep.subr.mxu0 0.0
    %1482 = vmatpush1.msra.mxu0 0.0
    %1483 = vmatprep.mubr.f32.mxu0 0.0
    %1484 = vmatmul.mubr.f32.gmra.mrb[0].mxu0 %v1417
    %v1485 = vpop.f32.mrb[0].mxu0
    %v1486 = vadd.f32 0.0, %v1485
    %v1487 = vpop.f32.mrb[0].mxu0
    %1488 = vdwg.mxu0
    %1491 = vrot.lane.b32.xlu0 %v1106, 8
    %v1492 = vpop.permute.xlu0 %1491
    %1493 = vrot.lane.b32.xlu0 %v1182, 8
    %v1494 = vpop.permute.xlu0 %1493
    %1499 = vrot.lane.b32.xlu0 %v1258, 16
    %v1500 = vpop.permute.xlu0 %1499
    %1501 = vrot.lane.b32.xlu0 %v1334, 16
    %v1502 = vpop.permute.xlu0 %1501
    %1507 = vrot.lane.b32.xlu0 %v1410, 24
    %v1508 = vpop.permute.xlu0 %1507
    %1509 = vrot.lane.b32.xlu0 %v1486, 24
    %v1510 = vpop.permute.xlu0 %1509
    %v1513 = vsel %vm168, %v954, %v1492
    %v1514 = vsel %vm168, %v1030, %v1494
    %vm1515 = vcmask 130048
    %v1516 = vsel %vm1515, %v1513, %v1500
    %v1517 = vsel %vm1515, %v1514, %v1502
    %vm1518 = vcmask 195584
    %v1519 = vsel %vm1518, %v1516, %v1508
    %v1520 = vsel %vm1518, %v1517, %v1510
    %v1521 = vld [vmem:[#allocation7] sm:$0xff]
    %v1522 = vld [vmem:[#allocation7 + $0x8] sm:$0xff]
    %v1523 = vld [vmem:[#allocation7 + $0x10] sm:$0xff]
    %v1524 = vld [vmem:[#allocation7 + $0x18] sm:$0xff]
    %v1525 = vld [vmem:[%s3] sm:$0x1]
    %v1527 = vlaneseq
    %v1528 = vshrl.u32 %v1527, 7
    %v1529 = vsub.s32 0, %v1528
    %v1530 = vrot.slane %v1525, %v1529
    %v1533 = vsel %vm65, %v1519, 0
    %v1536 = vsel %vm65, %v1520, 0
    %1538 = vmatprep.subr.mxu0 0.0
    %1539 = vmatpush1.msra.mxu0 %v1521
    %1540 = vmatprep.subr.mxu0 0.0
    %1541 = vmatpush1.msra.mxu0 %v1522
    %1542 = vmatprep.subr.mxu0 0.0
    %1543 = vmatpush1.msra.mxu0 %v1523
    %1544 = vmatprep.subr.mxu0 0.0
    %1545 = vmatpush1.msra.mxu0 %v1524
    %1546 = vmatprep.subr.mxu0 0.0
    %1547 = vmatpush1.msra.mxu0 0.0
    %1548 = vmatprep.subr.mxu0 0.0
    %1549 = vmatpush1.msra.mxu0 0.0
    %1550 = vmatprep.subr.mxu0 0.0
    %1551 = vmatpush1.msra.mxu0 0.0
    %1552 = vmatprep.subr.mxu0 0.0
    %1553 = vmatpush1.msra.mxu0 0.0
    %1554 = vmatprep.subr.mxu0 0.0
    %1555 = vmatpush1.msra.mxu0 0.0
    %1556 = vmatprep.subr.mxu0 0.0
    %1557 = vmatpush1.msra.mxu0 0.0
    %1558 = vmatprep.subr.mxu0 0.0
    %1559 = vmatpush1.msra.mxu0 0.0
    %1560 = vmatprep.subr.mxu0 0.0
    %1561 = vmatpush1.msra.mxu0 0.0
    %1562 = vmatprep.subr.mxu0 0.0
    %1563 = vmatpush1.msra.mxu0 0.0
    %1564 = vmatprep.subr.mxu0 0.0
    %1565 = vmatpush1.msra.mxu0 0.0
    %1566 = vmatprep.subr.mxu0 0.0
    %1567 = vmatpush1.msra.mxu0 0.0
    %1568 = vmatprep.subr.mxu0 0.0
    %1569 = vmatpush1.msra.mxu0 0.0
    %1570 = vmatprep.subr.mxu0 0.0
    %1571 = vmatpush1.msra.mxu0 0.0
    %1572 = vmatprep.subr.mxu0 0.0
    %1573 = vmatpush1.msra.mxu0 0.0
    %1574 = vmatprep.subr.mxu0 0.0
    %1575 = vmatpush1.msra.mxu0 0.0
    %1576 = vmatprep.subr.mxu0 0.0
    %1577 = vmatpush1.msra.mxu0 0.0
    %1578 = vmatprep.subr.mxu0 0.0
    %1579 = vmatpush1.msra.mxu0 0.0
    %1580 = vmatprep.subr.mxu0 0.0
    %1581 = vmatpush1.msra.mxu0 0.0
    %1582 = vmatprep.subr.mxu0 0.0
    %1583 = vmatpush1.msra.mxu0 0.0
    %1584 = vmatprep.subr.mxu0 0.0
    %1585 = vmatpush1.msra.mxu0 0.0
    %1586 = vmatprep.subr.mxu0 0.0
    %1587 = vmatpush1.msra.mxu0 0.0
    %1588 = vmatprep.subr.mxu0 0.0
    %1589 = vmatpush1.msra.mxu0 0.0
    %1590 = vmatprep.subr.mxu0 0.0
    %1591 = vmatpush1.msra.mxu0 0.0
    %1592 = vmatprep.subr.mxu0 0.0
    %1593 = vmatpush1.msra.mxu0 0.0
    %1594 = vmatprep.subr.mxu0 0.0
    %1595 = vmatpush1.msra.mxu0 0.0
    %1596 = vmatprep.subr.mxu0 0.0
    %1597 = vmatpush1.msra.mxu0 0.0
    %1598 = vmatprep.subr.mxu0 0.0
    %1599 = vmatpush1.msra.mxu0 0.0
    %1600 = vmatprep.subr.mxu0 0.0
    %1601 = vmatpush1.msra.mxu0 0.0
    %1602 = vmatprep.mubr.f32.mxu0 0.0
    %1603 = vmatmul.mubr.f32.gmra.mrb[0].mxu0 %v1533
    %v1604 = vpop.f32.mrb[0].mxu0
    %v1605 = vadd.f32 %v1530, %v1604
    %v1606 = vpop.f32.mrb[0].mxu0
    %1607 = vmatprep.mubr.f32.mxu0 0.0
    %1608 = vmatmul.mubr.f32.gmra.mrb[0].mxu0 %v1536
    %v1609 = vpop.f32.mrb[0].mxu0
    %v1610 = vadd.f32 %v1530, %v1609
    %v1611 = vpop.f32.mrb[0].mxu0
    %1612 = vdwg.mxu0
    %1613 = vst.msk [vmem:[#allocation8] sm:$0xff] %vm65, %v1605
    %1614 = vst.msk [vmem:[#allocation8 + $0x8] sm:$0xff] %vm65, %v1610
    // Predicated region
    $region30: #{tpu_custom_call.1} parent=1 // pred_check
      _
    $region31: #{tpu_custom_call.1} parent=1 // pred_check_branch
      %1616 = sbr.rel (0) target = $region33
    $region32: #{tpu_custom_call.1} parent=1 // pred_region
      %s1618 = ssub.s32 256, 256
      %1619 = vsyncadd [#allocation4], %s1618
      %s1620 = sshll.u32 [#allocation8], 4
      %s1621 = int_to_ptr.vmem [resolvable:$true] %s1620
      %1626 = dma.vmem_to_hbm [thread:$0]  %s1621, 256, %s4, [#allocation4], 128, 128, 8
    $region33: #{tpu_custom_call.1} parent=1 // pred_fallthru
      _
    // Predicated region
    $region34: #{tpu_custom_call.1} parent=1 // pred_check
      _
    $region35: #{tpu_custom_call.1} parent=1 // pred_check_branch
      %1628 = sbr.rel (0) target = $region37
    $region36: #{tpu_custom_call.1} parent=1 // pred_region
      %1629 = dma.done [#allocation4], 256
    $region37: #{tpu_custom_call.1} parent=1 // pred_fallthru
      _
    %1630 = vsyncpa [#allocation3], 1
    %1631 = vsyncpa [#allocation6], 1
    %1632 = vsyncpa [#allocation4], 1

</llo_original>
